<compile_context>
chip_gen: v5e
topology: v5e:2x2
jax: 0.10.0
libtpu: 0.0.40
codegen_flags: <defaults>
</compile_context>

<pallas_src>
import jax
import jax.numpy as jnp
from jax.experimental import pallas as pl
from jax.experimental.pallas import tpu as pltpu

TEXT_DIM = 768
AUDIO_DIM = 768
HIDDEN = 512
NUM_CLASSES = 2
OUT_PAD = 128  # lane-dense padded logits width


def _round_up(x, m):
    return (x + m - 1) // m * m


def _fusion_kernel(text_ref, audio_ref, w1t_ref, w1a_ref, b1_ref,
                   w2_ref, b2_ref, out_ref, acc_ref):
    t = pl.program_id(0)

    @pl.when(t == 0)
    def _():
        acc_ref[...] = jnp.zeros_like(acc_ref)

    # Streaming reduce over this T tile: raw sum in f32 (1/T folded into w1a).
    acc_ref[...] += jnp.sum(audio_ref[...].astype(jnp.float32), axis=1)

    @pl.when(t == pl.num_programs(0) - 1)
    def _():
        audio_feat = acc_ref[...].astype(jnp.bfloat16)        # (B, 768)
        # concat + Linear(1536, 512) as two bf16 MXU matmuls with f32 accum.
        h = (jnp.dot(text_ref[...], w1t_ref[...],
                     preferred_element_type=jnp.float32)
             + jnp.dot(audio_feat, w1a_ref[...],
                       preferred_element_type=jnp.float32)
             + b1_ref[...])                                    # f32 (B, 512)
        h = jnp.maximum(h, 0.0)                                # ReLU in f32 (v5e-safe)
        # Dropout(0.2): identity in eval/inference mode.
        # TODO(synk): training-mode dropout (pltpu.prng_random_bits mask) not emitted.
        logits = (jnp.dot(h.astype(jnp.bfloat16), w2_ref[...],
                          preferred_element_type=jnp.float32)
                  + b2_ref[...])                               # f32 (B, 128), padded
        out_ref[...] = logits


def sarcasm_fusion_forward(text_output, audio_last_hidden, params, block_t=256):
    """text_output: (B, 768) f32; audio_last_hidden: (B, T, 768) f32."""
    B, T, _ = audio_last_hidden.shape
    w1_text, w1_audio, b1, w2, b2 = params

    # Fold the 1/T mean scale into the audio half of W1 (kernel sums raw frames).
    w1_audio_scaled = w1_audio * (1.0 / T)

    # bf16 for HBM-resident MXU operands; biases stay f32 (post-MXU path is f32).
    text_bf = text_output.astype(jnp.bfloat16)
    w1t_bf = w1_text.astype(jnp.bfloat16)
    w1a_bf = w1_audio_scaled.astype(jnp.bfloat16)
    w2_pad = jnp.zeros((HIDDEN, OUT_PAD), jnp.float32).at[:, :NUM_CLASSES].set(w2)
    w2_bf = w2_pad.astype(jnp.bfloat16)
    b2_pad = jnp.zeros((1, OUT_PAD), jnp.float32).at[:, :NUM_CLASSES].set(b2)

    # Tile T; pad with zero frames (zeros don't change the sum, and the 1/T
    # scale above uses the true T, so the mean stays exact).
    bt = min(block_t, _round_up(T, 8))
    t_pad = _round_up(T, bt)
    if t_pad != T:
        audio_last_hidden = jnp.pad(
            audio_last_hidden, ((0, 0), (0, t_pad - T), (0, 0)))
    audio_bf = audio_last_hidden.astype(jnp.bfloat16)
    num_t = t_pad // bt

    grid_spec = pltpu.PrefetchScalarGridSpec(
        num_scalar_prefetch=0,
        grid=(num_t,),
        in_specs=[
            # Constant index maps -> fetched once, resident across the T loop.
            pl.BlockSpec((B, TEXT_DIM), lambda t: (0, 0)),
            pl.BlockSpec((B, bt, AUDIO_DIM), lambda t: (0, t, 0)),
            pl.BlockSpec((TEXT_DIM, HIDDEN), lambda t: (0, 0)),
            pl.BlockSpec((AUDIO_DIM, HIDDEN), lambda t: (0, 0)),
            pl.BlockSpec((1, HIDDEN), lambda t: (0, 0)),
            pl.BlockSpec((HIDDEN, OUT_PAD), lambda t: (0, 0)),
            pl.BlockSpec((1, OUT_PAD), lambda t: (0, 0)),
        ],
        out_specs=pl.BlockSpec((B, OUT_PAD), lambda t: (0, 0)),
        scratch_shapes=[pltpu.VMEM((B, AUDIO_DIM), jnp.float32)],
    )

    out_padded = pl.pallas_call(
        _fusion_kernel,
        out_shape=jax.ShapeDtypeStruct((B, OUT_PAD), jnp.float32),
        grid_spec=grid_spec,
        compiler_params=pltpu.CompilerParams(
            dimension_semantics=("arbitrary",)),  # T is a reduction axis
    )(text_bf, audio_bf, w1t_bf, w1a_bf, b1, w2_bf, b2_pad)

    return out_padded[:, :NUM_CLASSES]


def init_params(key):
    """Deterministic init matching nn.Linear(1536,512) and nn.Linear(512,2)."""
    k1, k2, k3, k4 = jax.random.split(key, 4)
    fan_in1 = TEXT_DIM + AUDIO_DIM
    lim1 = 1.0 / jnp.sqrt(fan_in1)
    w1 = jax.random.uniform(k1, (fan_in1, HIDDEN), jnp.float32, -lim1, lim1)
    b1 = jax.random.uniform(k2, (1, HIDDEN), jnp.float32, -lim1, lim1)
    lim2 = 1.0 / jnp.sqrt(HIDDEN)
    w2 = jax.random.uniform(k3, (HIDDEN, NUM_CLASSES), jnp.float32, -lim2, lim2)
    b2 = jax.random.uniform(k4, (1, NUM_CLASSES), jnp.float32, -lim2, lim2)
    # Split W1 into text / audio halves (equivalent to the concat along features).
    w1_text = w1[:TEXT_DIM, :]
    w1_audio = w1[TEXT_DIM:, :]
    return (w1_text, w1_audio, b1, w2, b2)


def reference_forward(text_output, audio_last_hidden, params):
    w1_text, w1_audio, b1, w2, b2 = params
    audio_mean = jnp.mean(audio_last_hidden, axis=1)
    combined = jnp.concatenate([text_output, audio_mean], axis=1)
    w1 = jnp.concatenate([w1_text, w1_audio], axis=0)
    h = jnp.maximum(combined @ w1 + b1, 0.0)
    return h @ w2 + b2


if __name__ == "__main__":
    key = jax.random.PRNGKey(0)
    k_txt, k_aud, k_aud2, k_par = jax.random.split(key, 4)
    params = init_params(k_par)

    # Small case from the module spec: batch of 2, 8 audio frames.
    B, T = 2, 8
    text_output = jax.random.normal(k_txt, (B, TEXT_DIM), jnp.float32)
    audio_last_hidden = jax.random.normal(k_aud, (B, T, AUDIO_DIM), jnp.float32)

    logits = sarcasm_fusion_forward(text_output, audio_last_hidden, params)
    logits = jax.block_until_ready(logits)
    ref = reference_forward(text_output, audio_last_hidden, params)
    assert logits.shape == (B, NUM_CLASSES)
    # bf16 MXU operands with f32 accumulation -> loosened tolerance vs f32 ref.
    assert jnp.allclose(logits, ref, atol=5e-2, rtol=5e-2), "mismatch vs reference (T=8)"

    # Longer sequence exercising the T-tiled accumulator + zero-pad tail
    # (T=300 -> block_t=128, 3 grid steps, 84 padded frames).
    T2 = 300
    audio_long = jax.random.normal(k_aud2, (B, T2, AUDIO_DIM), jnp.float32)
    logits2 = sarcasm_fusion_forward(text_output, audio_long, params, block_t=128)
    logits2 = jax.block_until_ready(logits2)
    ref2 = reference_forward(text_output, audio_long, params)
    assert jnp.allclose(logits2, ref2, atol=5e-2, rtol=5e-2), "mismatch vs reference (T=300)"

    print("KERNEL_OK")
</pallas_src>

<mosaic_0001>
module attributes {stable_mosaic.version = 11 : i64} {
  func.func @_fusion_kernel(%arg0: i32, %arg1: memref<2x768xbf16, #tpu.memory_space<vmem>>, %arg2: memref<2x8x768xbf16, #tpu.memory_space<vmem>>, %arg3: memref<768x512xbf16, #tpu.memory_space<vmem>>, %arg4: memref<768x512xbf16, #tpu.memory_space<vmem>>, %arg5: memref<1x512xf32, #tpu.memory_space<vmem>>, %arg6: memref<512x128xbf16, #tpu.memory_space<vmem>>, %arg7: memref<1x128xf32, #tpu.memory_space<vmem>>, %arg8: memref<2x128xf32, #tpu.memory_space<vmem>>, %arg9: memref<2x768xf32, #tpu.memory_space<vmem>>) attributes {dimension_semantics = [#tpu.dimension_semantics<arbitrary>], iteration_bounds = array<i64: 1>, scalar_prefetch = 0 : i64, scratch_operands = 1 : i64, tpu.core_type = #tpu.core_type<tc>, window_params = [{pipeline_mode = #tpu.pipeline_mode<synchronous>, transform_indices = @transform_0, window_bounds = array<i64: 2, 768>}, {transform_indices = @transform_1, window_bounds = array<i64: 2, 8, 768>}, {pipeline_mode = #tpu.pipeline_mode<synchronous>, transform_indices = @transform_2, window_bounds = array<i64: 768, 512>}, {pipeline_mode = #tpu.pipeline_mode<synchronous>, transform_indices = @transform_3, window_bounds = array<i64: 768, 512>}, {pipeline_mode = #tpu.pipeline_mode<synchronous>, transform_indices = @transform_4, window_bounds = array<i64: 1, 512>}, {pipeline_mode = #tpu.pipeline_mode<synchronous>, transform_indices = @transform_5, window_bounds = array<i64: 512, 128>}, {pipeline_mode = #tpu.pipeline_mode<synchronous>, transform_indices = @transform_6, window_bounds = array<i64: 1, 128>}, {pipeline_mode = #tpu.pipeline_mode<synchronous>, transform_indices = @transform_7, window_bounds = array<i64: 2, 128>}]} {
    %c0_i32 = arith.constant 0 : i32
    %0 = arith.cmpi eq, %arg0, %c0_i32 : i32
    %1 = arith.extui %0 : i1 to i32
    %c0_i32_0 = arith.constant 0 : i32
    %2 = arith.cmpi ne, %1, %c0_i32_0 : i32
    scf.if %2 {
      %cst_9 = arith.constant 0.000000e+00 : f32
      %12 = vector.broadcast %cst_9 : f32 to vector<2x768xf32>
      %c0_10 = arith.constant 0 : index
      %c0_11 = arith.constant 0 : index
      %13 = vector.load %arg9[%c0_10, %c0_11] : memref<2x768xf32, #tpu.memory_space<vmem>>, vector<2x768xf32>
      tpu.vector_store %arg9[%c0_10, %c0_11], %12 {strides = array<i32>} : memref<2x768xf32, #tpu.memory_space<vmem>>, vector<2x768xf32>,
    } else {
    }
    %c0 = arith.constant 0 : index
    %c0_1 = arith.constant 0 : index
    %3 = vector.load %arg9[%c0, %c0_1] : memref<2x768xf32, #tpu.memory_space<vmem>>, vector<2x768xf32>
    %c0_2 = arith.constant 0 : index
    %c0_3 = arith.constant 0 : index
    %c0_4 = arith.constant 0 : index
    %4 = vector.load %arg2[%c0_2, %c0_3, %c0_4] : memref<2x8x768xbf16, #tpu.memory_space<vmem>>, vector<2x8x768xbf16>
    %5 = arith.extf %4 : vector<2x8x768xbf16> to vector<2x8x768xf32>
    %cst = arith.constant dense<0.000000e+00> : vector<2x768xf32>
    %6 = vector.multi_reduction <add>, %5, %cst [1] : vector<2x8x768xf32> to vector<2x768xf32>
    %7 = arith.addf %3, %6 : vector<2x768xf32>
    %c0_5 = arith.constant 0 : index
    %c0_6 = arith.constant 0 : index
    %8 = vector.load %arg9[%c0_5, %c0_6] : memref<2x768xf32, #tpu.memory_space<vmem>>, vector<2x768xf32>
    tpu.vector_store %arg9[%c0_5, %c0_6], %7 {strides = array<i32>} : memref<2x768xf32, #tpu.memory_space<vmem>>, vector<2x768xf32>,
    %c0_i32_7 = arith.constant 0 : i32
    %9 = arith.cmpi eq, %arg0, %c0_i32_7 : i32
    %10 = arith.extui %9 : i1 to i32
    %c0_i32_8 = arith.constant 0 : i32
    %11 = arith.cmpi ne, %10, %c0_i32_8 : i32
    scf.if %11 {
      %c0_9 = arith.constant 0 : index
      %c0_10 = arith.constant 0 : index
      %12 = vector.load %arg9[%c0_9, %c0_10] : memref<2x768xf32, #tpu.memory_space<vmem>>, vector<2x768xf32>
      %13 = arith.truncf %12 : vector<2x768xf32> to vector<2x768xbf16>
      %c0_11 = arith.constant 0 : index
      %c0_12 = arith.constant 0 : index
      %14 = vector.load %arg1[%c0_11, %c0_12] : memref<2x768xbf16, #tpu.memory_space<vmem>>, vector<2x768xbf16>
      %c0_13 = arith.constant 0 : index
      %c0_14 = arith.constant 0 : index
      %15 = vector.load %arg3[%c0_13, %c0_14] : memref<768x512xbf16, #tpu.memory_space<vmem>>, vector<768x512xbf16>
      %cst_15 = arith.constant dense<0.000000e+00> : vector<2x512xf32>
      %16 = tpu.matmul %14, %15, %cst_15 {dimension_numbers = #tpu.dot_dimension_numbers<[1], [0], [0], [1], [0, 0, 1, 1], [], []>} : vector<2x768xbf16>, vector<768x512xbf16>, vector<2x512xf32> -> vector<2x512xf32>
      %c0_16 = arith.constant 0 : index
      %c0_17 = arith.constant 0 : index
      %17 = vector.load %arg4[%c0_16, %c0_17] : memref<768x512xbf16, #tpu.memory_space<vmem>>, vector<768x512xbf16>
      %cst_18 = arith.constant dense<0.000000e+00> : vector<2x512xf32>
      %18 = tpu.matmul %13, %17, %cst_18 {dimension_numbers = #tpu.dot_dimension_numbers<[1], [0], [0], [1], [0, 0, 1, 1], [], []>} : vector<2x768xbf16>, vector<768x512xbf16>, vector<2x512xf32> -> vector<2x512xf32>
      %19 = arith.addf %16, %18 : vector<2x512xf32>
      %c0_19 = arith.constant 0 : index
      %c0_20 = arith.constant 0 : index
      %20 = vector.load %arg5[%c0_19, %c0_20] : memref<1x512xf32, #tpu.memory_space<vmem>>, vector<1x512xf32>
      %21 = vector.broadcast %20 : vector<1x512xf32> to vector<2x512xf32>
      %22 = arith.addf %19, %21 : vector<2x512xf32>
      %cst_21 = arith.constant 0.000000e+00 : f32
      %23 = vector.broadcast %cst_21 : f32 to vector<2x512xf32>
      %24 = arith.maximumf %22, %23 : vector<2x512xf32>
      %25 = arith.truncf %24 : vector<2x512xf32> to vector<2x512xbf16>
      %c0_22 = arith.constant 0 : index
      %c0_23 = arith.constant 0 : index
      %26 = vector.load %arg6[%c0_22, %c0_23] : memref<512x128xbf16, #tpu.memory_space<vmem>>, vector<512x128xbf16>
      %cst_24 = arith.constant dense<0.000000e+00> : vector<2x128xf32>
      %27 = tpu.matmul %25, %26, %cst_24 {dimension_numbers = #tpu.dot_dimension_numbers<[1], [0], [0], [1], [0, 0, 1, 1], [], []>} : vector<2x512xbf16>, vector<512x128xbf16>, vector<2x128xf32> -> vector<2x128xf32>
      %c0_25 = arith.constant 0 : index
      %c0_26 = arith.constant 0 : index
      %28 = vector.load %arg7[%c0_25, %c0_26] : memref<1x128xf32, #tpu.memory_space<vmem>>, vector<1x128xf32>
      %29 = vector.broadcast %28 : vector<1x128xf32> to vector<2x128xf32>
      %30 = arith.addf %27, %29 : vector<2x128xf32>
      %c0_27 = arith.constant 0 : index
      %c0_28 = arith.constant 0 : index
      %31 = vector.load %arg8[%c0_27, %c0_28] : memref<2x128xf32, #tpu.memory_space<vmem>>, vector<2x128xf32>
      tpu.vector_store %arg8[%c0_27, %c0_28], %30 {strides = array<i32>} : memref<2x128xf32, #tpu.memory_space<vmem>>, vector<2x128xf32>,
    } else {
    }
    return
  }
  func.func @transform_0(%arg0: i32) -> (i32, i32) {
    %c0_i32 = arith.constant 0 : i32
    %c0_i32_0 = arith.constant 0 : i32
    %c0_i32_1 = arith.constant 0 : i32
    return %c0_i32, %c0_i32_0 : i32, i32
  }
  func.func @transform_1(%arg0: i32) -> (i32, i32, i32) {
    %c0_i32 = arith.constant 0 : i32
    %c0_i32_0 = arith.constant 0 : i32
    %c0_i32_1 = arith.constant 0 : i32
    return %c0_i32, %arg0, %c0_i32_0 : i32, i32, i32
  }
  func.func @transform_2(%arg0: i32) -> (i32, i32) {
    %c0_i32 = arith.constant 0 : i32
    %c0_i32_0 = arith.constant 0 : i32
    %c0_i32_1 = arith.constant 0 : i32
    return %c0_i32, %c0_i32_0 : i32, i32
  }
  func.func @transform_3(%arg0: i32) -> (i32, i32) {
    %c0_i32 = arith.constant 0 : i32
    %c0_i32_0 = arith.constant 0 : i32
    %c0_i32_1 = arith.constant 0 : i32
    return %c0_i32, %c0_i32_0 : i32, i32
  }
  func.func @transform_4(%arg0: i32) -> (i32, i32) {
    %c0_i32 = arith.constant 0 : i32
    %c0_i32_0 = arith.constant 0 : i32
    %c0_i32_1 = arith.constant 0 : i32
    return %c0_i32, %c0_i32_0 : i32, i32
  }
  func.func @transform_5(%arg0: i32) -> (i32, i32) {
    %c0_i32 = arith.constant 0 : i32
    %c0_i32_0 = arith.constant 0 : i32
    %c0_i32_1 = arith.constant 0 : i32
    return %c0_i32, %c0_i32_0 : i32, i32
  }
  func.func @transform_6(%arg0: i32) -> (i32, i32) {
    %c0_i32 = arith.constant 0 : i32
    %c0_i32_0 = arith.constant 0 : i32
    %c0_i32_1 = arith.constant 0 : i32
    return %c0_i32, %c0_i32_0 : i32, i32
  }
  func.func @transform_7(%arg0: i32) -> (i32, i32) {
    %c0_i32 = arith.constant 0 : i32
    %c0_i32_0 = arith.constant 0 : i32
    %c0_i32_1 = arith.constant 0 : i32
    return %c0_i32, %c0_i32_0 : i32, i32
  }
}

</mosaic_0001>

<llo_original>
// kernel: tpu_custom_call.1
$region0: #{tpu_custom_call.1}
  #allocation0 [shape = 'u32[]', space=smem, size = 0x4, offset = 0x4, fixed_abs, tag = 'smem constant byte address 0x4 - core index']
  #allocation1 [shape = 'u32[72,128]{1,0:T(1,128)}', space=vmem, size = 0x9000, scoped, tag = 'internal scratch']
  #allocation2 [shape = 'f32[2,768]{1,0:T(2,128)}', space=vmem, size = 0x1800, scoped, tag = 'scratch operand']
  %s0 = inlined_call_operand.hbm [shape: bf16[2,768], index: 0, kind: input, shape index: {}]
  %s1 = inlined_call_operand.hbm [shape: bf16[2,8,768], index: 1, kind: input, shape index: {}]
  %s2 = inlined_call_operand.hbm [shape: bf16[768,512], index: 2, kind: input, shape index: {}]
  %s3 = inlined_call_operand.hbm [shape: bf16[768,512], index: 3, kind: input, shape index: {}]
  %s4 = inlined_call_operand.hbm [shape: f32[1,512], index: 4, kind: input, shape index: {}]
  %s5 = inlined_call_operand.hbm [shape: bf16[512,128], index: 5, kind: input, shape index: {}]
  %s6 = inlined_call_operand.vmem [shape: f32[1,128], index: 6, kind: input, shape index: {}]
  %s7 = inlined_call_operand.hbm [shape: f32[2,128], index: 7, kind: output, shape index: {}]
  %s8 = sld [smem:[#allocation0]]
  $region70: #{tpu_custom_call.1} parent=0
    _
  %s10 = ssub.s32 1, %s8
  %s11 = scalar_select 0, %s10, %s8
  $region1: #{tpu_custom_call.1} parent=0
    #allocation3 [shape = 'u8[3072]{0}', space=vmem, size = 0xc00, scoped, tag = 'input window, operand 0, single buffered']
    #allocation4 [shape = 's32[1]{0}', space=sflag, size = 0x4, scoped, tag = 'scoped memory for tpu_custom_call.1']
    #allocation5 [shape = 's32[1]{0}', space=sflag, size = 0x4, scoped, tag = 'scoped memory for tpu_custom_call.1']
    #allocation6 [shape = 'u8[24576]{0}', space=vmem, size = 0x6000, scoped, tag = 'input window, operand 1, single buffered']
    #allocation7 [shape = 's32[1]{0}', space=sflag, size = 0x4, scoped, tag = 'scoped memory for tpu_custom_call.1']
    #allocation8 [shape = 'u8[786432]{0}', space=vmem, size = 0xc0000, scoped, tag = 'input window, operand 2, single buffered']
    #allocation9 [shape = 'u8[786432]{0}', space=vmem, size = 0xc0000, scoped, tag = 'input window, operand 3, single buffered']
    #allocation10 [shape = 's32[1]{0}', space=sflag, size = 0x4, scoped, tag = 'scoped memory for tpu_custom_call.1']
    #allocation11 [shape = 'u8[2048]{0}', space=vmem, size = 0x800, scoped, tag = 'input window, operand 4, single buffered']
    #allocation12 [shape = 'u8[131072]{0}', space=vmem, size = 0x20000, scoped, tag = 'input window, operand 5, single buffered']
    #allocation13 [shape = 's32[1]{0}', space=sflag, size = 0x4, scoped, tag = 'scoped memory for tpu_custom_call.1']
    #allocation14 [shape = 'u8[1024]{0}', space=vmem, size = 0x400, scoped, tag = 'output window, operand 0, single buffered']
    %12 = vsyncpa [#allocation4], 0
    %13 = vsyncpa [#allocation7], 0
    %14 = vsyncpa [#allocation10], 0
    %15 = vsyncpa [#allocation13], 0
    %16 = vsyncpa [#allocation5], 0
    // Predicated region
    $region2: #{tpu_custom_call.1} parent=1 // pred_check
      _
    $region3: #{tpu_custom_call.1} parent=1 // pred_check_branch
      %18 = sbr.rel (0) target = $region5
    $region4: #{tpu_custom_call.1} parent=1 // pred_region
      %20 = vsyncadd [#allocation4], 0
      %s22 = sshll.u32 %s0, 4
      %s23 = int_to_ptr.hbm [resolvable:$true] %s22
      %s24 = sshll.u32 [#allocation3], 4
      %s25 = int_to_ptr.vmem [resolvable:$true] %s24
      %27 = dma.hbm_to_vmem [thread:$0]  %s23, 96, %s25, [#allocation4]
    $region5: #{tpu_custom_call.1} parent=1 // pred_fallthru
      _
    // Predicated region
    $region6: #{tpu_custom_call.1} parent=1 // pred_check
      _
    $region7: #{tpu_custom_call.1} parent=1 // pred_check_branch
      %29 = sbr.rel (0) target = $region9
    $region8: #{tpu_custom_call.1} parent=1 // pred_region
      %31 = vsyncadd [#allocation7], 0
      %s32 = sshll.u32 %s1, 4
      %s33 = int_to_ptr.hbm [resolvable:$true] %s32
      %s34 = sshll.u32 [#allocation6], 4
      %s35 = int_to_ptr.vmem [resolvable:$true] %s34
      %40 = dma.hbm_to_vmem [thread:$0]  %s33, 768, %s35, [#allocation7], 384, 384, 24
    $region9: #{tpu_custom_call.1} parent=1 // pred_fallthru
      _
    // Predicated region
    $region10: #{tpu_custom_call.1} parent=1 // pred_check
      _
    $region11: #{tpu_custom_call.1} parent=1 // pred_check_branch
      %42 = sbr.rel (0) target = $region13
    $region12: #{tpu_custom_call.1} parent=1 // pred_region
      %44 = vsyncadd [#allocation7], 0
      %s45 = sshll.u32 %s2, 4
      %s46 = int_to_ptr.hbm [resolvable:$true] %s45
      %s47 = sshll.u32 [#allocation8], 4
      %s48 = int_to_ptr.vmem [resolvable:$true] %s47
      %53 = dma.hbm_to_vmem [thread:$0]  %s46, 24576, %s48, [#allocation7], 256, 256, 16
    $region13: #{tpu_custom_call.1} parent=1 // pred_fallthru
      _
    // Predicated region
    $region14: #{tpu_custom_call.1} parent=1 // pred_check
      _
    $region15: #{tpu_custom_call.1} parent=1 // pred_check_branch
      %55 = sbr.rel (0) target = $region17
    $region16: #{tpu_custom_call.1} parent=1 // pred_region
      %57 = vsyncadd [#allocation10], 0
      %s58 = sshll.u32 %s3, 4
      %s59 = int_to_ptr.hbm [resolvable:$true] %s58
      %s60 = sshll.u32 [#allocation9], 4
      %s61 = int_to_ptr.vmem [resolvable:$true] %s60
      %66 = dma.hbm_to_vmem [thread:$0]  %s59, 24576, %s61, [#allocation10], 256, 256, 16
    $region17: #{tpu_custom_call.1} parent=1 // pred_fallthru
      _
    // Predicated region
    $region18: #{tpu_custom_call.1} parent=1 // pred_check
      _
    $region19: #{tpu_custom_call.1} parent=1 // pred_check_branch
      %68 = sbr.rel (0) target = $region21
    $region20: #{tpu_custom_call.1} parent=1 // pred_region
      %70 = vsyncadd [#allocation10], 0
      %s72 = sshll.u32 %s4, 4
      %s73 = int_to_ptr.hbm [resolvable:$true] %s72
      %s74 = sshll.u32 [#allocation11], 4
      %s75 = int_to_ptr.vmem [resolvable:$true] %s74
      %77 = dma.hbm_to_vmem [thread:$0]  %s73, 64, %s75, [#allocation10]
    $region21: #{tpu_custom_call.1} parent=1 // pred_fallthru
      _
    // Predicated region
    $region22: #{tpu_custom_call.1} parent=1 // pred_check
      _
    $region23: #{tpu_custom_call.1} parent=1 // pred_check_branch
      %79 = sbr.rel (0) target = $region25
    $region24: #{tpu_custom_call.1} parent=1 // pred_region
      %81 = vsyncadd [#allocation13], 0
      %s82 = sshll.u32 %s5, 4
      %s83 = int_to_ptr.hbm [resolvable:$true] %s82
      %s84 = sshll.u32 [#allocation12], 4
      %s85 = int_to_ptr.vmem [resolvable:$true] %s84
      %90 = dma.hbm_to_vmem [thread:$0]  %s83, 4096, %s85, [#allocation13], 64, 64, 4
    $region25: #{tpu_custom_call.1} parent=1 // pred_fallthru
      _
    // Predicated region
    $region26: #{tpu_custom_call.1} parent=1 // pred_check
      _
    $region27: #{tpu_custom_call.1} parent=1 // pred_check_branch
      %92 = sbr.rel (0) target = $region29
    $region28: #{tpu_custom_call.1} parent=1 // pred_region
      _
    $region29: #{tpu_custom_call.1} parent=1 // pred_fallthru
      _
    // Predicated region
    $region30: #{tpu_custom_call.1} parent=1 // pred_check
      _
    $region31: #{tpu_custom_call.1} parent=1 // pred_check_branch
      %94 = sbr.rel (0) target = $region33
    $region32: #{tpu_custom_call.1} parent=1 // pred_region
      %96 = dma.done [#allocation4], 96
    $region33: #{tpu_custom_call.1} parent=1 // pred_fallthru
      _
    // Predicated region
    $region34: #{tpu_custom_call.1} parent=1 // pred_check
      _
    $region35: #{tpu_custom_call.1} parent=1 // pred_check_branch
      %98 = sbr.rel (0) target = $region37
    $region36: #{tpu_custom_call.1} parent=1 // pred_region
      %100 = dma.done [#allocation7], 768
    $region37: #{tpu_custom_call.1} parent=1 // pred_fallthru
      _
    // Predicated region
    $region38: #{tpu_custom_call.1} parent=1 // pred_check
      _
    $region39: #{tpu_custom_call.1} parent=1 // pred_check_branch
      %102 = sbr.rel (0) target = $region41
    $region40: #{tpu_custom_call.1} parent=1 // pred_region
      %104 = dma.done [#allocation7], 24576
    $region41: #{tpu_custom_call.1} parent=1 // pred_fallthru
      _
    // Predicated region
    $region42: #{tpu_custom_call.1} parent=1 // pred_check
      _
    $region43: #{tpu_custom_call.1} parent=1 // pred_check_branch
      %106 = sbr.rel (0) target = $region45
    $region44: #{tpu_custom_call.1} parent=1 // pred_region
      %108 = dma.done [#allocation10], 24576
    $region45: #{tpu_custom_call.1} parent=1 // pred_fallthru
      _
    // Predicated region
    $region46: #{tpu_custom_call.1} parent=1 // pred_check
      _
    $region47: #{tpu_custom_call.1} parent=1 // pred_check_branch
      %110 = sbr.rel (0) target = $region49
    $region48: #{tpu_custom_call.1} parent=1 // pred_region
      %112 = dma.done [#allocation10], 64
    $region49: #{tpu_custom_call.1} parent=1 // pred_fallthru
      _
    // Predicated region
    $region50: #{tpu_custom_call.1} parent=1 // pred_check
      _
    $region51: #{tpu_custom_call.1} parent=1 // pred_check_branch
      %114 = sbr.rel (0) target = $region53
    $region52: #{tpu_custom_call.1} parent=1 // pred_region
      %116 = dma.done [#allocation13], 4096
    $region53: #{tpu_custom_call.1} parent=1 // pred_fallthru
      _
    %p117 = scmp.eq.s32.totalorder 0, 0
    // Predicated region
    $region54: #{tpu_custom_call.1} parent=1 // pred_check
      %p118 = pneg %p117
    $region55: #{tpu_custom_call.1} parent=1 // pred_check_branch
      %120 = sbr.rel (%p118) target = $region57
    $region56: #{tpu_custom_call.1} parent=1 // pred_region
      %121 = vst [vmem:[#allocation2] sm:$0xff] 0.0
      %122 = vst [vmem:[#allocation2 + $0x8] sm:$0xf] 0.0
    $region57: #{tpu_custom_call.1} parent=1 // pred_fallthru
      _
    %v123 = vld [vmem:[#allocation2] sm:$0xff]
    %v124 = vld [vmem:[#allocation2 + $0x8] sm:$0xf]
    %v125 = vld [vmem:[#allocation6] sm:$0xff]
    %v126 = vld [vmem:[#allocation6 + $0x8] sm:$0xff]
    %v127 = vld [vmem:[#allocation6 + $0x10] sm:$0xff]
    %v128 = vld [vmem:[#allocation6 + $0x18] sm:$0xff]
    %v129 = vld [vmem:[#allocation6 + $0x20] sm:$0xff]
    %v130 = vld [vmem:[#allocation6 + $0x28] sm:$0xff]
    %v131 = vunpack.c.l.bf16 %v125
    %v132 = vunpack.c.h.bf16 %v125
    %v133 = vunpack.c.l.bf16 %v126
    %v134 = vunpack.c.h.bf16 %v126
    %v135 = vunpack.c.l.bf16 %v127
    %v136 = vunpack.c.h.bf16 %v127
    %v137 = vunpack.c.l.bf16 %v128
    %v138 = vunpack.c.h.bf16 %v128
    %v139 = vunpack.c.l.bf16 %v129
    %v140 = vunpack.c.h.bf16 %v129
    %v141 = vunpack.c.l.bf16 %v130
    %v142 = vunpack.c.h.bf16 %v130
    %v143 = vrot.slane %v131, 4
    %v144 = vadd.f32 %v131, %v143
    %v145 = vrot.slane %v144, 2
    %v146 = vadd.f32 %v144, %v145
    %v147 = vrot.slane %v146, 1
    %v148 = vadd.f32 %v146, %v147
    %v149 = vrot.slane %v132, 4
    %v150 = vadd.f32 %v132, %v149
    %v151 = vrot.slane %v150, 2
    %v152 = vadd.f32 %v150, %v151
    %v153 = vrot.slane %v152, 1
    %v154 = vadd.f32 %v152, %v153
    %v155 = vrot.slane %v133, 4
    %v156 = vadd.f32 %v133, %v155
    %v157 = vrot.slane %v156, 2
    %v158 = vadd.f32 %v156, %v157
    %v159 = vrot.slane %v158, 1
    %v160 = vadd.f32 %v158, %v159
    %v161 = vrot.slane %v134, 4
    %v162 = vadd.f32 %v134, %v161
    %v163 = vrot.slane %v162, 2
    %v164 = vadd.f32 %v162, %v163
    %v165 = vrot.slane %v164, 1
    %v166 = vadd.f32 %v164, %v165
    %v167 = vrot.slane %v135, 4
    %v168 = vadd.f32 %v135, %v167
    %v169 = vrot.slane %v168, 2
    %v170 = vadd.f32 %v168, %v169
    %v171 = vrot.slane %v170, 1
    %v172 = vadd.f32 %v170, %v171
    %v173 = vrot.slane %v136, 4
    %v174 = vadd.f32 %v136, %v173
    %v175 = vrot.slane %v174, 2
    %v176 = vadd.f32 %v174, %v175
    %v177 = vrot.slane %v176, 1
    %v178 = vadd.f32 %v176, %v177
    %v179 = vrot.slane %v137, 4
    %v180 = vadd.f32 %v137, %v179
    %v181 = vrot.slane %v180, 2
    %v182 = vadd.f32 %v180, %v181
    %v183 = vrot.slane %v182, 1
    %v184 = vadd.f32 %v182, %v183
    %v185 = vrot.slane %v138, 4
    %v186 = vadd.f32 %v138, %v185
    %v187 = vrot.slane %v186, 2
    %v188 = vadd.f32 %v186, %v187
    %v189 = vrot.slane %v188, 1
    %v190 = vadd.f32 %v188, %v189
    %v191 = vrot.slane %v139, 4
    %v192 = vadd.f32 %v139, %v191
    %v193 = vrot.slane %v192, 2
    %v194 = vadd.f32 %v192, %v193
    %v195 = vrot.slane %v194, 1
    %v196 = vadd.f32 %v194, %v195
    %v197 = vrot.slane %v140, 4
    %v198 = vadd.f32 %v140, %v197
    %v199 = vrot.slane %v198, 2
    %v200 = vadd.f32 %v198, %v199
    %v201 = vrot.slane %v200, 1
    %v202 = vadd.f32 %v200, %v201
    %v203 = vrot.slane %v141, 4
    %v204 = vadd.f32 %v141, %v203
    %v205 = vrot.slane %v204, 2
    %v206 = vadd.f32 %v204, %v205
    %v207 = vrot.slane %v206, 1
    %v208 = vadd.f32 %v206, %v207
    %v209 = vrot.slane %v142, 4
    %v210 = vadd.f32 %v142, %v209
    %v211 = vrot.slane %v210, 2
    %v212 = vadd.f32 %v210, %v211
    %v213 = vrot.slane %v212, 1
    %v214 = vadd.f32 %v212, %v213
    %v227 = vrot.slane %v154, 6
    %v228 = vrot.slane %v160, 4
    %v229 = vrot.slane %v166, 2
    %v230 = vrot.slane %v178, 6
    %v231 = vrot.slane %v190, 6
    %v232 = vrot.slane %v196, 4
    %v233 = vrot.slane %v202, 2
    %v234 = vrot.slane %v214, 6
    %vm235 = vcmask 1041408
    %v236 = vsel %vm235, %v148, %v227
    %vm237 = vcmask 1045508
    %v238 = vsel %vm237, %v228, %v229
    %vm239 = vcmask 1043456
    %v240 = vsel %vm239, %v236, %v238
    %v241 = vsel %vm235, %v172, %v230
    %v242 = vsel %vm235, %v184, %v231
    %v243 = vsel %vm237, %v232, %v233
    %v244 = vsel %vm239, %v242, %v243
    %v245 = vsel %vm235, %v208, %v234
    %vm246 = vcmask 1044484
    %v247 = vsel %vm246, %v240, %v240
    %vm248 = vcmask 1046534
    %v249 = vsel %vm248, %v240, %v247
    %v250 = vrot.slane %v244, 7
    %vm251 = vcmask 1041409
    %v252 = vsel %vm251, %v250, %v249
    %vm253 = vcmask 1043459
    %v254 = vsel %vm253, %v250, %v252
    %vm255 = vcmask 1045509
    %v256 = vsel %vm255, %v250, %v254
    %vm257 = vcmask 1047559
    %v258 = vsel %vm257, %v250, %v256
    %v259 = vsel %vm246, %v241, %v241
    %v260 = vsel %vm248, %v241, %v259
    %v261 = vrot.slane %v245, 7
    %v262 = vsel %vm251, %v261, %v260
    %v263 = vsel %vm253, %v261, %v262
    %v264 = vsel %vm255, %v261, %v263
    %v265 = vsel %vm257, %v261, %v264
    %v268 = vadd.f32 %v123, %v258
    %v269 = vadd.f32 %v124, %v265
    %270 = vst [vmem:[#allocation2] sm:$0xff] %v268
    %271 = vst [vmem:[#allocation2 + $0x8] sm:$0xf] %v269
    // Predicated region
    $region58: #{tpu_custom_call.1} parent=1 // pred_check
      %p272 = pneg %p117
    $region59: #{tpu_custom_call.1} parent=1 // pred_check_branch
      %274 = sbr.rel (%p272) target = $region61
    $region60: #{tpu_custom_call.1} parent=1 // pred_region
      %v275 = vld [vmem:[#allocation2] sm:$0xff]
      %v276 = vld [vmem:[#allocation2 + $0x8] sm:$0xf]
      %279 = vst [vmem:[#allocation1] ss:$4 sm:$0xff] %v275
      %s280 = scalar_lea.vmem [#allocation1], 32
      %281 = vst [vmem:[%s280] ss:$4 sm:$0xff] %v276
      %v282 = vld.sshfl [vmem:[#allocation1] sm:$0xff pattern:$0x73625140]
      %v283 = vld.sshfl [vmem:[#allocation1 + $0x8] sm:$0xff pattern:$0x73625140]
      %v284 = vld.sshfl [vmem:[#allocation1 + $0x10] sm:$0xff pattern:$0x73625140]
      %v285 = vld.sshfl [vmem:[#allocation1 + $0x18] sm:$0xff pattern:$0x73625140]
      %v286 = vld.sshfl [vmem:[#allocation1 + $0x20] sm:$0xff pattern:$0x73625140]
      %v287 = vld.sshfl [vmem:[#allocation1 + $0x28] sm:$0xff pattern:$0x73625140]
      %v294 = vpack.c.bf16 %v282, %v282
      %v295 = vpack.c.bf16 %v283, %v283
      %v296 = vpack.c.bf16 %v284, %v284
      %v297 = vpack.c.bf16 %v285, %v285
      %v298 = vpack.c.bf16 %v286, %v286
      %v299 = vpack.c.bf16 %v287, %v287
      %v300 = vld [vmem:[#allocation3] sm:$0x3f]
      %v301 = vld [vmem:[#allocation8] sm:$0xff]
      %v302 = vld [vmem:[#allocation8 + $0x8] sm:$0xff]
      %v303 = vld [vmem:[#allocation8 + $0x10] sm:$0xff]
      %v304 = vld [vmem:[#allocation8 + $0x18] sm:$0xff]
      %v305 = vld [vmem:[#allocation8 + $0x20] sm:$0xff]
      %v306 = vld [vmem:[#allocation8 + $0x28] sm:$0xff]
      %v307 = vld [vmem:[#allocation8 + $0x30] sm:$0xff]
      %v308 = vld [vmem:[#allocation8 + $0x38] sm:$0xff]
      %v309 = vld [vmem:[#allocation8 + $0x40] sm:$0xff]
      %v310 = vld [vmem:[#allocation8 + $0x48] sm:$0xff]
      %v311 = vld [vmem:[#allocation8 + $0x50] sm:$0xff]
      %v312 = vld [vmem:[#allocation8 + $0x58] sm:$0xff]
      %v313 = vld [vmem:[#allocation8 + $0x60] sm:$0xff]
      %v314 = vld [vmem:[#allocation8 + $0x68] sm:$0xff]
      %v315 = vld [vmem:[#allocation8 + $0x70] sm:$0xff]
      %v316 = vld [vmem:[#allocation8 + $0x78] sm:$0xff]
      %v317 = vld [vmem:[#allocation8 + $0x80] sm:$0xff]
      %v318 = vld [vmem:[#allocation8 + $0x88] sm:$0xff]
      %v319 = vld [vmem:[#allocation8 + $0x90] sm:$0xff]
      %v320 = vld [vmem:[#allocation8 + $0x98] sm:$0xff]
      %v321 = vld [vmem:[#allocation8 + $0xa0] sm:$0xff]
      %v322 = vld [vmem:[#allocation8 + $0xa8] sm:$0xff]
      %v323 = vld [vmem:[#allocation8 + $0xb0] sm:$0xff]
      %v324 = vld [vmem:[#allocation8 + $0xb8] sm:$0xff]
      %v325 = vld [vmem:[#allocation8 + $0xc0] sm:$0xff]
      %v326 = vld [vmem:[#allocation8 + $0xc8] sm:$0xff]
      %v327 = vld [vmem:[#allocation8 + $0xd0] sm:$0xff]
      %v328 = vld [vmem:[#allocation8 + $0xd8] sm:$0xff]
      %v329 = vld [vmem:[#allocation8 + $0xe0] sm:$0xff]
      %v330 = vld [vmem:[#allocation8 + $0xe8] sm:$0xff]
      %v331 = vld [vmem:[#allocation8 + $0xf0] sm:$0xff]
      %v332 = vld [vmem:[#allocation8 + $0xf8] sm:$0xff]
      %v333 = vld [vmem:[#allocation8 + $0x100] sm:$0xff]
      %v334 = vld [vmem:[#allocation8 + $0x108] sm:$0xff]
      %v335 = vld [vmem:[#allocation8 + $0x110] sm:$0xff]
      %v336 = vld [vmem:[#allocation8 + $0x118] sm:$0xff]
      %v337 = vld [vmem:[#allocation8 + $0x120] sm:$0xff]
      %v338 = vld [vmem:[#allocation8 + $0x128] sm:$0xff]
      %v339 = vld [vmem:[#allocation8 + $0x130] sm:$0xff]
      %v340 = vld [vmem:[#allocation8 + $0x138] sm:$0xff]
      %v341 = vld [vmem:[#allocation8 + $0x140] sm:$0xff]
      %v342 = vld [vmem:[#allocation8 + $0x148] sm:$0xff]
      %v343 = vld [vmem:[#allocation8 + $0x150] sm:$0xff]
      %v344 = vld [vmem:[#allocation8 + $0x158] sm:$0xff]
      %v345 = vld [vmem:[#allocation8 + $0x160] sm:$0xff]
      %v346 = vld [vmem:[#allocation8 + $0x168] sm:$0xff]
      %v347 = vld [vmem:[#allocation8 + $0x170] sm:$0xff]
      %v348 = vld [vmem:[#allocation8 + $0x178] sm:$0xff]
      %v349 = vld [vmem:[#allocation8 + $0x180] sm:$0xff]
      %v350 = vld [vmem:[#allocation8 + $0x188] sm:$0xff]
      %v351 = vld [vmem:[#allocation8 + $0x190] sm:$0xff]
      %v352 = vld [vmem:[#allocation8 + $0x198] sm:$0xff]
      %v353 = vld [vmem:[#allocation8 + $0x1a0] sm:$0xff]
      %v354 = vld [vmem:[#allocation8 + $0x1a8] sm:$0xff]
      %v355 = vld [vmem:[#allocation8 + $0x1b0] sm:$0xff]
      %v356 = vld [vmem:[#allocation8 + $0x1b8] sm:$0xff]
      %v357 = vld [vmem:[#allocation8 + $0x1c0] sm:$0xff]
      %v358 = vld [vmem:[#allocation8 + $0x1c8] sm:$0xff]
      %v359 = vld [vmem:[#allocation8 + $0x1d0] sm:$0xff]
      %v360 = vld [vmem:[#allocation8 + $0x1d8] sm:$0xff]
      %v361 = vld [vmem:[#allocation8 + $0x1e0] sm:$0xff]
      %v362 = vld [vmem:[#allocation8 + $0x1e8] sm:$0xff]
      %v363 = vld [vmem:[#allocation8 + $0x1f0] sm:$0xff]
      %v364 = vld [vmem:[#allocation8 + $0x1f8] sm:$0xff]
      %v365 = vld [vmem:[#allocation8 + $0x200] sm:$0xff]
      %v366 = vld [vmem:[#allocation8 + $0x208] sm:$0xff]
      %v367 = vld [vmem:[#allocation8 + $0x210] sm:$0xff]
      %v368 = vld [vmem:[#allocation8 + $0x218] sm:$0xff]
      %v369 = vld [vmem:[#allocation8 + $0x220] sm:$0xff]
      %v370 = vld [vmem:[#allocation8 + $0x228] sm:$0xff]
      %v371 = vld [vmem:[#allocation8 + $0x230] sm:$0xff]
      %v372 = vld [vmem:[#allocation8 + $0x238] sm:$0xff]
      %v373 = vld [vmem:[#allocation8 + $0x240] sm:$0xff]
      %v374 = vld [vmem:[#allocation8 + $0x248] sm:$0xff]
      %v375 = vld [vmem:[#allocation8 + $0x250] sm:$0xff]
      %v376 = vld [vmem:[#allocation8 + $0x258] sm:$0xff]
      %v377 = vld [vmem:[#allocation8 + $0x260] sm:$0xff]
      %v378 = vld [vmem:[#allocation8 + $0x268] sm:$0xff]
      %v379 = vld [vmem:[#allocation8 + $0x270] sm:$0xff]
      %v380 = vld [vmem:[#allocation8 + $0x278] sm:$0xff]
      %v381 = vld [vmem:[#allocation8 + $0x280] sm:$0xff]
      %v382 = vld [vmem:[#allocation8 + $0x288] sm:$0xff]
      %v383 = vld [vmem:[#allocation8 + $0x290] sm:$0xff]
      %v384 = vld [vmem:[#allocation8 + $0x298] sm:$0xff]
      %v385 = vld [vmem:[#allocation8 + $0x2a0] sm:$0xff]
      %v386 = vld [vmem:[#allocation8 + $0x2a8] sm:$0xff]
      %v387 = vld [vmem:[#allocation8 + $0x2b0] sm:$0xff]
      %v388 = vld [vmem:[#allocation8 + $0x2b8] sm:$0xff]
      %v389 = vld [vmem:[#allocation8 + $0x2c0] sm:$0xff]
      %v390 = vld [vmem:[#allocation8 + $0x2c8] sm:$0xff]
      %v391 = vld [vmem:[#allocation8 + $0x2d0] sm:$0xff]
      %v392 = vld [vmem:[#allocation8 + $0x2d8] sm:$0xff]
      %v393 = vld [vmem:[#allocation8 + $0x2e0] sm:$0xff]
      %v394 = vld [vmem:[#allocation8 + $0x2e8] sm:$0xff]
      %v395 = vld [vmem:[#allocation8 + $0x2f0] sm:$0xff]
      %v396 = vld [vmem:[#allocation8 + $0x2f8] sm:$0xff]
      %v397 = vld [vmem:[#allocation8 + $0x300] sm:$0xff]
      %v398 = vld [vmem:[#allocation8 + $0x308] sm:$0xff]
      %v399 = vld [vmem:[#allocation8 + $0x310] sm:$0xff]
      %v400 = vld [vmem:[#allocation8 + $0x318] sm:$0xff]
      %v401 = vld [vmem:[#allocation8 + $0x320] sm:$0xff]
      %v402 = vld [vmem:[#allocation8 + $0x328] sm:$0xff]
      %v403 = vld [vmem:[#allocation8 + $0x330] sm:$0xff]
      %v404 = vld [vmem:[#allocation8 + $0x338] sm:$0xff]
      %v405 = vld [vmem:[#allocation8 + $0x340] sm:$0xff]
      %v406 = vld [vmem:[#allocation8 + $0x348] sm:$0xff]
      %v407 = vld [vmem:[#allocation8 + $0x350] sm:$0xff]
      %v408 = vld [vmem:[#allocation8 + $0x358] sm:$0xff]
      %v409 = vld [vmem:[#allocation8 + $0x360] sm:$0xff]
      %v410 = vld [vmem:[#allocation8 + $0x368] sm:$0xff]
      %v411 = vld [vmem:[#allocation8 + $0x370] sm:$0xff]
      %v412 = vld [vmem:[#allocation8 + $0x378] sm:$0xff]
      %v413 = vld [vmem:[#allocation8 + $0x380] sm:$0xff]
      %v414 = vld [vmem:[#allocation8 + $0x388] sm:$0xff]
      %v415 = vld [vmem:[#allocation8 + $0x390] sm:$0xff]
      %v416 = vld [vmem:[#allocation8 + $0x398] sm:$0xff]
      %v417 = vld [vmem:[#allocation8 + $0x3a0] sm:$0xff]
      %v418 = vld [vmem:[#allocation8 + $0x3a8] sm:$0xff]
      %v419 = vld [vmem:[#allocation8 + $0x3b0] sm:$0xff]
      %v420 = vld [vmem:[#allocation8 + $0x3b8] sm:$0xff]
      %v421 = vld [vmem:[#allocation8 + $0x3c0] sm:$0xff]
      %v422 = vld [vmem:[#allocation8 + $0x3c8] sm:$0xff]
      %v423 = vld [vmem:[#allocation8 + $0x3d0] sm:$0xff]
      %v424 = vld [vmem:[#allocation8 + $0x3d8] sm:$0xff]
      %v425 = vld [vmem:[#allocation8 + $0x3e0] sm:$0xff]
      %v426 = vld [vmem:[#allocation8 + $0x3e8] sm:$0xff]
      %v427 = vld [vmem:[#allocation8 + $0x3f0] sm:$0xff]
      %v428 = vld [vmem:[#allocation8 + $0x3f8] sm:$0xff]
      %v429 = vld [vmem:[#allocation8 + $0x400] sm:$0xff]
      %v430 = vld [vmem:[#allocation8 + $0x408] sm:$0xff]
      %v431 = vld [vmem:[#allocation8 + $0x410] sm:$0xff]
      %v432 = vld [vmem:[#allocation8 + $0x418] sm:$0xff]
      %v433 = vld [vmem:[#allocation8 + $0x420] sm:$0xff]
      %v434 = vld [vmem:[#allocation8 + $0x428] sm:$0xff]
      %v435 = vld [vmem:[#allocation8 + $0x430] sm:$0xff]
      %v436 = vld [vmem:[#allocation8 + $0x438] sm:$0xff]
      %v437 = vld [vmem:[#allocation8 + $0x440] sm:$0xff]
      %v438 = vld [vmem:[#allocation8 + $0x448] sm:$0xff]
      %v439 = vld [vmem:[#allocation8 + $0x450] sm:$0xff]
      %v440 = vld [vmem:[#allocation8 + $0x458] sm:$0xff]
      %v441 = vld [vmem:[#allocation8 + $0x460] sm:$0xff]
      %v442 = vld [vmem:[#allocation8 + $0x468] sm:$0xff]
      %v443 = vld [vmem:[#allocation8 + $0x470] sm:$0xff]
      %v444 = vld [vmem:[#allocation8 + $0x478] sm:$0xff]
      %v445 = vld [vmem:[#allocation8 + $0x480] sm:$0xff]
      %v446 = vld [vmem:[#allocation8 + $0x488] sm:$0xff]
      %v447 = vld [vmem:[#allocation8 + $0x490] sm:$0xff]
      %v448 = vld [vmem:[#allocation8 + $0x498] sm:$0xff]
      %v449 = vld [vmem:[#allocation8 + $0x4a0] sm:$0xff]
      %v450 = vld [vmem:[#allocation8 + $0x4a8] sm:$0xff]
      %v451 = vld [vmem:[#allocation8 + $0x4b0] sm:$0xff]
      %v452 = vld [vmem:[#allocation8 + $0x4b8] sm:$0xff]
      %v453 = vld [vmem:[#allocation8 + $0x4c0] sm:$0xff]
      %v454 = vld [vmem:[#allocation8 + $0x4c8] sm:$0xff]
      %v455 = vld [vmem:[#allocation8 + $0x4d0] sm:$0xff]
      %v456 = vld [vmem:[#allocation8 + $0x4d8] sm:$0xff]
      %v457 = vld [vmem:[#allocation8 + $0x4e0] sm:$0xff]
      %v458 = vld [vmem:[#allocation8 + $0x4e8] sm:$0xff]
      %v459 = vld [vmem:[#allocation8 + $0x4f0] sm:$0xff]
      %v460 = vld [vmem:[#allocation8 + $0x4f8] sm:$0xff]
      %v461 = vld [vmem:[#allocation8 + $0x500] sm:$0xff]
      %v462 = vld [vmem:[#allocation8 + $0x508] sm:$0xff]
      %v463 = vld [vmem:[#allocation8 + $0x510] sm:$0xff]
      %v464 = vld [vmem:[#allocation8 + $0x518] sm:$0xff]
      %v465 = vld [vmem:[#allocation8 + $0x520] sm:$0xff]
      %v466 = vld [vmem:[#allocation8 + $0x528] sm:$0xff]
      %v467 = vld [vmem:[#allocation8 + $0x530] sm:$0xff]
      %v468 = vld [vmem:[#allocation8 + $0x538] sm:$0xff]
      %v469 = vld [vmem:[#allocation8 + $0x540] sm:$0xff]
      %v470 = vld [vmem:[#allocation8 + $0x548] sm:$0xff]
      %v471 = vld [vmem:[#allocation8 + $0x550] sm:$0xff]
      %v472 = vld [vmem:[#allocation8 + $0x558] sm:$0xff]
      %v473 = vld [vmem:[#allocation8 + $0x560] sm:$0xff]
      %v474 = vld [vmem:[#allocation8 + $0x568] sm:$0xff]
      %v475 = vld [vmem:[#allocation8 + $0x570] sm:$0xff]
      %v476 = vld [vmem:[#allocation8 + $0x578] sm:$0xff]
      %v477 = vld [vmem:[#allocation8 + $0x580] sm:$0xff]
      %v478 = vld [vmem:[#allocation8 + $0x588] sm:$0xff]
      %v479 = vld [vmem:[#allocation8 + $0x590] sm:$0xff]
      %v480 = vld [vmem:[#allocation8 + $0x598] sm:$0xff]
      %v481 = vld [vmem:[#allocation8 + $0x5a0] sm:$0xff]
      %v482 = vld [vmem:[#allocation8 + $0x5a8] sm:$0xff]
      %v483 = vld [vmem:[#allocation8 + $0x5b0] sm:$0xff]
      %v484 = vld [vmem:[#allocation8 + $0x5b8] sm:$0xff]
      %v485 = vld [vmem:[#allocation8 + $0x5c0] sm:$0xff]
      %v486 = vld [vmem:[#allocation8 + $0x5c8] sm:$0xff]
      %v487 = vld [vmem:[#allocation8 + $0x5d0] sm:$0xff]
      %v488 = vld [vmem:[#allocation8 + $0x5d8] sm:$0xff]
      %v489 = vld [vmem:[#allocation8 + $0x5e0] sm:$0xff]
      %v490 = vld [vmem:[#allocation8 + $0x5e8] sm:$0xff]
      %v491 = vld [vmem:[#allocation8 + $0x5f0] sm:$0xff]
      %v492 = vld [vmem:[#allocation8 + $0x5f8] sm:$0xff]
      %v493 = vld [vmem:[#allocation9] sm:$0xff]
      %v494 = vld [vmem:[#allocation9 + $0x8] sm:$0xff]
      %v495 = vld [vmem:[#allocation9 + $0x10] sm:$0xff]
      %v496 = vld [vmem:[#allocation9 + $0x18] sm:$0xff]
      %v497 = vld [vmem:[#allocation9 + $0x20] sm:$0xff]
      %v498 = vld [vmem:[#allocation9 + $0x28] sm:$0xff]
      %v499 = vld [vmem:[#allocation9 + $0x30] sm:$0xff]
      %v500 = vld [vmem:[#allocation9 + $0x38] sm:$0xff]
      %v501 = vld [vmem:[#allocation9 + $0x40] sm:$0xff]
      %v502 = vld [vmem:[#allocation9 + $0x48] sm:$0xff]
      %v503 = vld [vmem:[#allocation9 + $0x50] sm:$0xff]
      %v504 = vld [vmem:[#allocation9 + $0x58] sm:$0xff]
      %v505 = vld [vmem:[#allocation9 + $0x60] sm:$0xff]
      %v506 = vld [vmem:[#allocation9 + $0x68] sm:$0xff]
      %v507 = vld [vmem:[#allocation9 + $0x70] sm:$0xff]
      %v508 = vld [vmem:[#allocation9 + $0x78] sm:$0xff]
      %v509 = vld [vmem:[#allocation9 + $0x80] sm:$0xff]
      %v510 = vld [vmem:[#allocation9 + $0x88] sm:$0xff]
      %v511 = vld [vmem:[#allocation9 + $0x90] sm:$0xff]
      %v512 = vld [vmem:[#allocation9 + $0x98] sm:$0xff]
      %v513 = vld [vmem:[#allocation9 + $0xa0] sm:$0xff]
      %v514 = vld [vmem:[#allocation9 + $0xa8] sm:$0xff]
      %v515 = vld [vmem:[#allocation9 + $0xb0] sm:$0xff]
      %v516 = vld [vmem:[#allocation9 + $0xb8] sm:$0xff]
      %v517 = vld [vmem:[#allocation9 + $0xc0] sm:$0xff]
      %v518 = vld [vmem:[#allocation9 + $0xc8] sm:$0xff]
      %v519 = vld [vmem:[#allocation9 + $0xd0] sm:$0xff]
      %v520 = vld [vmem:[#allocation9 + $0xd8] sm:$0xff]
      %v521 = vld [vmem:[#allocation9 + $0xe0] sm:$0xff]
      %v522 = vld [vmem:[#allocation9 + $0xe8] sm:$0xff]
      %v523 = vld [vmem:[#allocation9 + $0xf0] sm:$0xff]
      %v524 = vld [vmem:[#allocation9 + $0xf8] sm:$0xff]
      %v525 = vld [vmem:[#allocation9 + $0x100] sm:$0xff]
      %v526 = vld [vmem:[#allocation9 + $0x108] sm:$0xff]
      %v527 = vld [vmem:[#allocation9 + $0x110] sm:$0xff]
      %v528 = vld [vmem:[#allocation9 + $0x118] sm:$0xff]
      %v529 = vld [vmem:[#allocation9 + $0x120] sm:$0xff]
      %v530 = vld [vmem:[#allocation9 + $0x128] sm:$0xff]
      %v531 = vld [vmem:[#allocation9 + $0x130] sm:$0xff]
      %v532 = vld [vmem:[#allocation9 + $0x138] sm:$0xff]
      %v533 = vld [vmem:[#allocation9 + $0x140] sm:$0xff]
      %v534 = vld [vmem:[#allocation9 + $0x148] sm:$0xff]
      %v535 = vld [vmem:[#allocation9 + $0x150] sm:$0xff]
      %v536 = vld [vmem:[#allocation9 + $0x158] sm:$0xff]
      %v537 = vld [vmem:[#allocation9 + $0x160] sm:$0xff]
      %v538 = vld [vmem:[#allocation9 + $0x168] sm:$0xff]
      %v539 = vld [vmem:[#allocation9 + $0x170] sm:$0xff]
      %v540 = vld [vmem:[#allocation9 + $0x178] sm:$0xff]
      %v541 = vld [vmem:[#allocation9 + $0x180] sm:$0xff]
      %v542 = vld [vmem:[#allocation9 + $0x188] sm:$0xff]
      %v543 = vld [vmem:[#allocation9 + $0x190] sm:$0xff]
      %v544 = vld [vmem:[#allocation9 + $0x198] sm:$0xff]
      %v545 = vld [vmem:[#allocation9 + $0x1a0] sm:$0xff]
      %v546 = vld [vmem:[#allocation9 + $0x1a8] sm:$0xff]
      %v547 = vld [vmem:[#allocation9 + $0x1b0] sm:$0xff]
      %v548 = vld [vmem:[#allocation9 + $0x1b8] sm:$0xff]
      %v549 = vld [vmem:[#allocation9 + $0x1c0] sm:$0xff]
      %v550 = vld [vmem:[#allocation9 + $0x1c8] sm:$0xff]
      %v551 = vld [vmem:[#allocation9 + $0x1d0] sm:$0xff]
      %v552 = vld [vmem:[#allocation9 + $0x1d8] sm:$0xff]
      %v553 = vld [vmem:[#allocation9 + $0x1e0] sm:$0xff]
      %v554 = vld [vmem:[#allocation9 + $0x1e8] sm:$0xff]
      %v555 = vld [vmem:[#allocation9 + $0x1f0] sm:$0xff]
      %v556 = vld [vmem:[#allocation9 + $0x1f8] sm:$0xff]
      %v557 = vld [vmem:[#allocation9 + $0x200] sm:$0xff]
      %v558 = vld [vmem:[#allocation9 + $0x208] sm:$0xff]
      %v559 = vld [vmem:[#allocation9 + $0x210] sm:$0xff]
      %v560 = vld [vmem:[#allocation9 + $0x218] sm:$0xff]
      %v561 = vld [vmem:[#allocation9 + $0x220] sm:$0xff]
      %v562 = vld [vmem:[#allocation9 + $0x228] sm:$0xff]
      %v563 = vld [vmem:[#allocation9 + $0x230] sm:$0xff]
      %v564 = vld [vmem:[#allocation9 + $0x238] sm:$0xff]
      %v565 = vld [vmem:[#allocation9 + $0x240] sm:$0xff]
      %v566 = vld [vmem:[#allocation9 + $0x248] sm:$0xff]
      %v567 = vld [vmem:[#allocation9 + $0x250] sm:$0xff]
      %v568 = vld [vmem:[#allocation9 + $0x258] sm:$0xff]
      %v569 = vld [vmem:[#allocation9 + $0x260] sm:$0xff]
      %v570 = vld [vmem:[#allocation9 + $0x268] sm:$0xff]
      %v571 = vld [vmem:[#allocation9 + $0x270] sm:$0xff]
      %v572 = vld [vmem:[#allocation9 + $0x278] sm:$0xff]
      %v573 = vld [vmem:[#allocation9 + $0x280] sm:$0xff]
      %v574 = vld [vmem:[#allocation9 + $0x288] sm:$0xff]
      %v575 = vld [vmem:[#allocation9 + $0x290] sm:$0xff]
      %v576 = vld [vmem:[#allocation9 + $0x298] sm:$0xff]
      %v577 = vld [vmem:[#allocation9 + $0x2a0] sm:$0xff]
      %v578 = vld [vmem:[#allocation9 + $0x2a8] sm:$0xff]
      %v579 = vld [vmem:[#allocation9 + $0x2b0] sm:$0xff]
      %v580 = vld [vmem:[#allocation9 + $0x2b8] sm:$0xff]
      %v581 = vld [vmem:[#allocation9 + $0x2c0] sm:$0xff]
      %v582 = vld [vmem:[#allocation9 + $0x2c8] sm:$0xff]
      %v583 = vld [vmem:[#allocation9 + $0x2d0] sm:$0xff]
      %v584 = vld [vmem:[#allocation9 + $0x2d8] sm:$0xff]
      %v585 = vld [vmem:[#allocation9 + $0x2e0] sm:$0xff]
      %v586 = vld [vmem:[#allocation9 + $0x2e8] sm:$0xff]
      %v587 = vld [vmem:[#allocation9 + $0x2f0] sm:$0xff]
      %v588 = vld [vmem:[#allocation9 + $0x2f8] sm:$0xff]
      %v589 = vld [vmem:[#allocation9 + $0x300] sm:$0xff]
      %v590 = vld [vmem:[#allocation9 + $0x308] sm:$0xff]
      %v591 = vld [vmem:[#allocation9 + $0x310] sm:$0xff]
      %v592 = vld [vmem:[#allocation9 + $0x318] sm:$0xff]
      %v593 = vld [vmem:[#allocation9 + $0x320] sm:$0xff]
      %v594 = vld [vmem:[#allocation9 + $0x328] sm:$0xff]
      %v595 = vld [vmem:[#allocation9 + $0x330] sm:$0xff]
      %v596 = vld [vmem:[#allocation9 + $0x338] sm:$0xff]
      %v597 = vld [vmem:[#allocation9 + $0x340] sm:$0xff]
      %v598 = vld [vmem:[#allocation9 + $0x348] sm:$0xff]
      %v599 = vld [vmem:[#allocation9 + $0x350] sm:$0xff]
      %v600 = vld [vmem:[#allocation9 + $0x358] sm:$0xff]
      %v601 = vld [vmem:[#allocation9 + $0x360] sm:$0xff]
      %v602 = vld [vmem:[#allocation9 + $0x368] sm:$0xff]
      %v603 = vld [vmem:[#allocation9 + $0x370] sm:$0xff]
      %v604 = vld [vmem:[#allocation9 + $0x378] sm:$0xff]
      %v605 = vld [vmem:[#allocation9 + $0x380] sm:$0xff]
      %v606 = vld [vmem:[#allocation9 + $0x388] sm:$0xff]
      %v607 = vld [vmem:[#allocation9 + $0x390] sm:$0xff]
      %v608 = vld [vmem:[#allocation9 + $0x398] sm:$0xff]
      %v609 = vld [vmem:[#allocation9 + $0x3a0] sm:$0xff]
      %v610 = vld [vmem:[#allocation9 + $0x3a8] sm:$0xff]
      %v611 = vld [vmem:[#allocation9 + $0x3b0] sm:$0xff]
      %v612 = vld [vmem:[#allocation9 + $0x3b8] sm:$0xff]
      %v613 = vld [vmem:[#allocation9 + $0x3c0] sm:$0xff]
      %v614 = vld [vmem:[#allocation9 + $0x3c8] sm:$0xff]
      %v615 = vld [vmem:[#allocation9 + $0x3d0] sm:$0xff]
      %v616 = vld [vmem:[#allocation9 + $0x3d8] sm:$0xff]
      %v617 = vld [vmem:[#allocation9 + $0x3e0] sm:$0xff]
      %v618 = vld [vmem:[#allocation9 + $0x3e8] sm:$0xff]
      %v619 = vld [vmem:[#allocation9 + $0x3f0] sm:$0xff]
      %v620 = vld [vmem:[#allocation9 + $0x3f8] sm:$0xff]
      %v621 = vld [vmem:[#allocation9 + $0x400] sm:$0xff]
      %v622 = vld [vmem:[#allocation9 + $0x408] sm:$0xff]
      %v623 = vld [vmem:[#allocation9 + $0x410] sm:$0xff]
      %v624 = vld [vmem:[#allocation9 + $0x418] sm:$0xff]
      %v625 = vld [vmem:[#allocation9 + $0x420] sm:$0xff]
      %v626 = vld [vmem:[#allocation9 + $0x428] sm:$0xff]
      %v627 = vld [vmem:[#allocation9 + $0x430] sm:$0xff]
      %v628 = vld [vmem:[#allocation9 + $0x438] sm:$0xff]
      %v629 = vld [vmem:[#allocation9 + $0x440] sm:$0xff]
      %v630 = vld [vmem:[#allocation9 + $0x448] sm:$0xff]
      %v631 = vld [vmem:[#allocation9 + $0x450] sm:$0xff]
      %v632 = vld [vmem:[#allocation9 + $0x458] sm:$0xff]
      %v633 = vld [vmem:[#allocation9 + $0x460] sm:$0xff]
      %v634 = vld [vmem:[#allocation9 + $0x468] sm:$0xff]
      %v635 = vld [vmem:[#allocation9 + $0x470] sm:$0xff]
      %v636 = vld [vmem:[#allocation9 + $0x478] sm:$0xff]
      %v637 = vld [vmem:[#allocation9 + $0x480] sm:$0xff]
      %v638 = vld [vmem:[#allocation9 + $0x488] sm:$0xff]
      %v639 = vld [vmem:[#allocation9 + $0x490] sm:$0xff]
      %v640 = vld [vmem:[#allocation9 + $0x498] sm:$0xff]
      %v641 = vld [vmem:[#allocation9 + $0x4a0] sm:$0xff]
      %v642 = vld [vmem:[#allocation9 + $0x4a8] sm:$0xff]
      %v643 = vld [vmem:[#allocation9 + $0x4b0] sm:$0xff]
      %v644 = vld [vmem:[#allocation9 + $0x4b8] sm:$0xff]
      %v645 = vld [vmem:[#allocation9 + $0x4c0] sm:$0xff]
      %v646 = vld [vmem:[#allocation9 + $0x4c8] sm:$0xff]
      %v647 = vld [vmem:[#allocation9 + $0x4d0] sm:$0xff]
      %v648 = vld [vmem:[#allocation9 + $0x4d8] sm:$0xff]
      %v649 = vld [vmem:[#allocation9 + $0x4e0] sm:$0xff]
      %v650 = vld [vmem:[#allocation9 + $0x4e8] sm:$0xff]
      %v651 = vld [vmem:[#allocation9 + $0x4f0] sm:$0xff]
      %v652 = vld [vmem:[#allocation9 + $0x4f8] sm:$0xff]
      %v653 = vld [vmem:[#allocation9 + $0x500] sm:$0xff]
      %v654 = vld [vmem:[#allocation9 + $0x508] sm:$0xff]
      %v655 = vld [vmem:[#allocation9 + $0x510] sm:$0xff]
      %v656 = vld [vmem:[#allocation9 + $0x518] sm:$0xff]
      %v657 = vld [vmem:[#allocation9 + $0x520] sm:$0xff]
      %v658 = vld [vmem:[#allocation9 + $0x528] sm:$0xff]
      %v659 = vld [vmem:[#allocation9 + $0x530] sm:$0xff]
      %v660 = vld [vmem:[#allocation9 + $0x538] sm:$0xff]
      %v661 = vld [vmem:[#allocation9 + $0x540] sm:$0xff]
      %v662 = vld [vmem:[#allocation9 + $0x548] sm:$0xff]
      %v663 = vld [vmem:[#allocation9 + $0x550] sm:$0xff]
      %v664 = vld [vmem:[#allocation9 + $0x558] sm:$0xff]
      %v665 = vld [vmem:[#allocation9 + $0x560] sm:$0xff]
      %v666 = vld [vmem:[#allocation9 + $0x568] sm:$0xff]
      %v667 = vld [vmem:[#allocation9 + $0x570] sm:$0xff]
      %v668 = vld [vmem:[#allocation9 + $0x578] sm:$0xff]
      %v669 = vld [vmem:[#allocation9 + $0x580] sm:$0xff]
      %v670 = vld [vmem:[#allocation9 + $0x588] sm:$0xff]
      %v671 = vld [vmem:[#allocation9 + $0x590] sm:$0xff]
      %v672 = vld [vmem:[#allocation9 + $0x598] sm:$0xff]
      %v673 = vld [vmem:[#allocation9 + $0x5a0] sm:$0xff]
      %v674 = vld [vmem:[#allocation9 + $0x5a8] sm:$0xff]
      %v675 = vld [vmem:[#allocation9 + $0x5b0] sm:$0xff]
      %v676 = vld [vmem:[#allocation9 + $0x5b8] sm:$0xff]
      %v677 = vld [vmem:[#allocation9 + $0x5c0] sm:$0xff]
      %v678 = vld [vmem:[#allocation9 + $0x5c8] sm:$0xff]
      %v679 = vld [vmem:[#allocation9 + $0x5d0] sm:$0xff]
      %v680 = vld [vmem:[#allocation9 + $0x5d8] sm:$0xff]
      %v681 = vld [vmem:[#allocation9 + $0x5e0] sm:$0xff]
      %v682 = vld [vmem:[#allocation9 + $0x5e8] sm:$0xff]
      %v683 = vld [vmem:[#allocation9 + $0x5f0] sm:$0xff]
      %v684 = vld [vmem:[#allocation9 + $0x5f8] sm:$0xff]
      %v877 = vunpack.c.l.b16 %v493
      %v878 = vunpack.c.h.b16 %v493
      %v879 = vunpack.c.l.b16 %v494
      %v880 = vunpack.c.h.b16 %v494
      %v881 = vunpack.c.l.b16 %v495
      %v882 = vunpack.c.h.b16 %v495
      %v883 = vunpack.c.l.b16 %v496
      %v884 = vunpack.c.h.b16 %v496
      %v885 = vunpack.c.l.b16 %v497
      %v886 = vunpack.c.h.b16 %v497
      %v887 = vunpack.c.l.b16 %v498
      %v888 = vunpack.c.h.b16 %v498
      %v889 = vunpack.c.l.b16 %v499
      %v890 = vunpack.c.h.b16 %v499
      %v891 = vunpack.c.l.b16 %v500
      %v892 = vunpack.c.h.b16 %v500
      %v893 = vunpack.c.l.b16 %v501
      %v894 = vunpack.c.h.b16 %v501
      %v895 = vunpack.c.l.b16 %v502
      %v896 = vunpack.c.h.b16 %v502
      %v897 = vunpack.c.l.b16 %v503
      %v898 = vunpack.c.h.b16 %v503
      %v899 = vunpack.c.l.b16 %v504
      %v900 = vunpack.c.h.b16 %v504
      %v901 = vunpack.c.l.b16 %v505
      %v902 = vunpack.c.h.b16 %v505
      %v903 = vunpack.c.l.b16 %v506
      %v904 = vunpack.c.h.b16 %v506
      %v905 = vunpack.c.l.b16 %v507
      %v906 = vunpack.c.h.b16 %v507
      %v907 = vunpack.c.l.b16 %v508
      %v908 = vunpack.c.h.b16 %v508
      %v909 = vunpack.c.l.b16 %v509
      %v910 = vunpack.c.h.b16 %v509
      %v911 = vunpack.c.l.b16 %v510
      %v912 = vunpack.c.h.b16 %v510
      %v913 = vunpack.c.l.b16 %v511
      %v914 = vunpack.c.h.b16 %v511
      %v915 = vunpack.c.l.b16 %v512
      %v916 = vunpack.c.h.b16 %v512
      %v917 = vunpack.c.l.b16 %v513
      %v918 = vunpack.c.h.b16 %v513
      %v919 = vunpack.c.l.b16 %v514
      %v920 = vunpack.c.h.b16 %v514
      %v921 = vunpack.c.l.b16 %v515
      %v922 = vunpack.c.h.b16 %v515
      %v923 = vunpack.c.l.b16 %v516
      %v924 = vunpack.c.h.b16 %v516
      %v925 = vunpack.c.l.b16 %v517
      %v926 = vunpack.c.h.b16 %v517
      %v927 = vunpack.c.l.b16 %v518
      %v928 = vunpack.c.h.b16 %v518
      %v929 = vunpack.c.l.b16 %v519
      %v930 = vunpack.c.h.b16 %v519
      %v931 = vunpack.c.l.b16 %v520
      %v932 = vunpack.c.h.b16 %v520
      %v933 = vunpack.c.l.b16 %v521
      %v934 = vunpack.c.h.b16 %v521
      %v935 = vunpack.c.l.b16 %v522
      %v936 = vunpack.c.h.b16 %v522
      %v937 = vunpack.c.l.b16 %v523
      %v938 = vunpack.c.h.b16 %v523
      %v939 = vunpack.c.l.b16 %v524
      %v940 = vunpack.c.h.b16 %v524
      %v941 = vunpack.c.l.b16 %v525
      %v942 = vunpack.c.h.b16 %v525
      %v943 = vunpack.c.l.b16 %v526
      %v944 = vunpack.c.h.b16 %v526
      %v945 = vunpack.c.l.b16 %v527
      %v946 = vunpack.c.h.b16 %v527
      %v947 = vunpack.c.l.b16 %v528
      %v948 = vunpack.c.h.b16 %v528
      %v949 = vunpack.c.l.b16 %v529
      %v950 = vunpack.c.h.b16 %v529
      %v951 = vunpack.c.l.b16 %v530
      %v952 = vunpack.c.h.b16 %v530
      %v953 = vunpack.c.l.b16 %v531
      %v954 = vunpack.c.h.b16 %v531
      %v955 = vunpack.c.l.b16 %v532
      %v956 = vunpack.c.h.b16 %v532
      %v957 = vunpack.c.l.b16 %v533
      %v958 = vunpack.c.h.b16 %v533
      %v959 = vunpack.c.l.b16 %v534
      %v960 = vunpack.c.h.b16 %v534
      %v961 = vunpack.c.l.b16 %v535
      %v962 = vunpack.c.h.b16 %v535
      %v963 = vunpack.c.l.b16 %v536
      %v964 = vunpack.c.h.b16 %v536
      %v965 = vunpack.c.l.b16 %v537
      %v966 = vunpack.c.h.b16 %v537
      %v967 = vunpack.c.l.b16 %v538
      %v968 = vunpack.c.h.b16 %v538
      %v969 = vunpack.c.l.b16 %v539
      %v970 = vunpack.c.h.b16 %v539
      %v971 = vunpack.c.l.b16 %v540
      %v972 = vunpack.c.h.b16 %v540
      %v973 = vunpack.c.l.b16 %v541
      %v974 = vunpack.c.h.b16 %v541
      %v975 = vunpack.c.l.b16 %v542
      %v976 = vunpack.c.h.b16 %v542
      %v977 = vunpack.c.l.b16 %v543
      %v978 = vunpack.c.h.b16 %v543
      %v979 = vunpack.c.l.b16 %v544
      %v980 = vunpack.c.h.b16 %v544
      %v981 = vunpack.c.l.b16 %v545
      %v982 = vunpack.c.h.b16 %v545
      %v983 = vunpack.c.l.b16 %v546
      %v984 = vunpack.c.h.b16 %v546
      %v985 = vunpack.c.l.b16 %v547
      %v986 = vunpack.c.h.b16 %v547
      %v987 = vunpack.c.l.b16 %v548
      %v988 = vunpack.c.h.b16 %v548
      %v989 = vunpack.c.l.b16 %v549
      %v990 = vunpack.c.h.b16 %v549
      %v991 = vunpack.c.l.b16 %v550
      %v992 = vunpack.c.h.b16 %v550
      %v993 = vunpack.c.l.b16 %v551
      %v994 = vunpack.c.h.b16 %v551
      %v995 = vunpack.c.l.b16 %v552
      %v996 = vunpack.c.h.b16 %v552
      %v997 = vunpack.c.l.b16 %v553
      %v998 = vunpack.c.h.b16 %v553
      %v999 = vunpack.c.l.b16 %v554
      %v1000 = vunpack.c.h.b16 %v554
      %v1001 = vunpack.c.l.b16 %v555
      %v1002 = vunpack.c.h.b16 %v555
      %v1003 = vunpack.c.l.b16 %v556
      %v1004 = vunpack.c.h.b16 %v556
      %v1005 = vunpack.c.l.b16 %v557
      %v1006 = vunpack.c.h.b16 %v557
      %v1007 = vunpack.c.l.b16 %v558
      %v1008 = vunpack.c.h.b16 %v558
      %v1009 = vunpack.c.l.b16 %v559
      %v1010 = vunpack.c.h.b16 %v559
      %v1011 = vunpack.c.l.b16 %v560
      %v1012 = vunpack.c.h.b16 %v560
      %v1013 = vunpack.c.l.b16 %v561
      %v1014 = vunpack.c.h.b16 %v561
      %v1015 = vunpack.c.l.b16 %v562
      %v1016 = vunpack.c.h.b16 %v562
      %v1017 = vunpack.c.l.b16 %v563
      %v1018 = vunpack.c.h.b16 %v563
      %v1019 = vunpack.c.l.b16 %v564
      %v1020 = vunpack.c.h.b16 %v564
      %v1021 = vunpack.c.l.b16 %v565
      %v1022 = vunpack.c.h.b16 %v565
      %v1023 = vunpack.c.l.b16 %v566
      %v1024 = vunpack.c.h.b16 %v566
      %v1025 = vunpack.c.l.b16 %v567
      %v1026 = vunpack.c.h.b16 %v567
      %v1027 = vunpack.c.l.b16 %v568
      %v1028 = vunpack.c.h.b16 %v568
      %v1029 = vunpack.c.l.b16 %v569
      %v1030 = vunpack.c.h.b16 %v569
      %v1031 = vunpack.c.l.b16 %v570
      %v1032 = vunpack.c.h.b16 %v570
      %v1033 = vunpack.c.l.b16 %v571
      %v1034 = vunpack.c.h.b16 %v571
      %v1035 = vunpack.c.l.b16 %v572
      %v1036 = vunpack.c.h.b16 %v572
      %v1037 = vunpack.c.l.b16 %v573
      %v1038 = vunpack.c.h.b16 %v573
      %v1039 = vunpack.c.l.b16 %v574
      %v1040 = vunpack.c.h.b16 %v574
      %v1041 = vunpack.c.l.b16 %v575
      %v1042 = vunpack.c.h.b16 %v575
      %v1043 = vunpack.c.l.b16 %v576
      %v1044 = vunpack.c.h.b16 %v576
      %v1045 = vunpack.c.l.b16 %v577
      %v1046 = vunpack.c.h.b16 %v577
      %v1047 = vunpack.c.l.b16 %v578
      %v1048 = vunpack.c.h.b16 %v578
      %v1049 = vunpack.c.l.b16 %v579
      %v1050 = vunpack.c.h.b16 %v579
      %v1051 = vunpack.c.l.b16 %v580
      %v1052 = vunpack.c.h.b16 %v580
      %v1053 = vunpack.c.l.b16 %v581
      %v1054 = vunpack.c.h.b16 %v581
      %v1055 = vunpack.c.l.b16 %v582
      %v1056 = vunpack.c.h.b16 %v582
      %v1057 = vunpack.c.l.b16 %v583
      %v1058 = vunpack.c.h.b16 %v583
      %v1059 = vunpack.c.l.b16 %v584
      %v1060 = vunpack.c.h.b16 %v584
      %v1061 = vunpack.c.l.b16 %v585
      %v1062 = vunpack.c.h.b16 %v585
      %v1063 = vunpack.c.l.b16 %v586
      %v1064 = vunpack.c.h.b16 %v586
      %v1065 = vunpack.c.l.b16 %v587
      %v1066 = vunpack.c.h.b16 %v587
      %v1067 = vunpack.c.l.b16 %v588
      %v1068 = vunpack.c.h.b16 %v588
      %v1069 = vunpack.c.l.b16 %v589
      %v1070 = vunpack.c.h.b16 %v589
      %v1071 = vunpack.c.l.b16 %v590
      %v1072 = vunpack.c.h.b16 %v590
      %v1073 = vunpack.c.l.b16 %v591
      %v1074 = vunpack.c.h.b16 %v591
      %v1075 = vunpack.c.l.b16 %v592
      %v1076 = vunpack.c.h.b16 %v592
      %v1077 = vunpack.c.l.b16 %v593
      %v1078 = vunpack.c.h.b16 %v593
      %v1079 = vunpack.c.l.b16 %v594
      %v1080 = vunpack.c.h.b16 %v594
      %v1081 = vunpack.c.l.b16 %v595
      %v1082 = vunpack.c.h.b16 %v595
      %v1083 = vunpack.c.l.b16 %v596
      %v1084 = vunpack.c.h.b16 %v596
      %v1085 = vunpack.c.l.b16 %v597
      %v1086 = vunpack.c.h.b16 %v597
      %v1087 = vunpack.c.l.b16 %v598
      %v1088 = vunpack.c.h.b16 %v598
      %v1089 = vunpack.c.l.b16 %v599
      %v1090 = vunpack.c.h.b16 %v599
      %v1091 = vunpack.c.l.b16 %v600
      %v1092 = vunpack.c.h.b16 %v600
      %v1093 = vunpack.c.l.b16 %v601
      %v1094 = vunpack.c.h.b16 %v601
      %v1095 = vunpack.c.l.b16 %v602
      %v1096 = vunpack.c.h.b16 %v602
      %v1097 = vunpack.c.l.b16 %v603
      %v1098 = vunpack.c.h.b16 %v603
      %v1099 = vunpack.c.l.b16 %v604
      %v1100 = vunpack.c.h.b16 %v604
      %v1101 = vunpack.c.l.b16 %v605
      %v1102 = vunpack.c.h.b16 %v605
      %v1103 = vunpack.c.l.b16 %v606
      %v1104 = vunpack.c.h.b16 %v606
      %v1105 = vunpack.c.l.b16 %v607
      %v1106 = vunpack.c.h.b16 %v607
      %v1107 = vunpack.c.l.b16 %v608
      %v1108 = vunpack.c.h.b16 %v608
      %v1109 = vunpack.c.l.b16 %v609
      %v1110 = vunpack.c.h.b16 %v609
      %v1111 = vunpack.c.l.b16 %v610
      %v1112 = vunpack.c.h.b16 %v610
      %v1113 = vunpack.c.l.b16 %v611
      %v1114 = vunpack.c.h.b16 %v611
      %v1115 = vunpack.c.l.b16 %v612
      %v1116 = vunpack.c.h.b16 %v612
      %v1117 = vunpack.c.l.b16 %v613
      %v1118 = vunpack.c.h.b16 %v613
      %v1119 = vunpack.c.l.b16 %v614
      %v1120 = vunpack.c.h.b16 %v614
      %v1121 = vunpack.c.l.b16 %v615
      %v1122 = vunpack.c.h.b16 %v615
      %v1123 = vunpack.c.l.b16 %v616
      %v1124 = vunpack.c.h.b16 %v616
      %v1125 = vunpack.c.l.b16 %v617
      %v1126 = vunpack.c.h.b16 %v617
      %v1127 = vunpack.c.l.b16 %v618
      %v1128 = vunpack.c.h.b16 %v618
      %v1129 = vunpack.c.l.b16 %v619
      %v1130 = vunpack.c.h.b16 %v619
      %v1131 = vunpack.c.l.b16 %v620
      %v1132 = vunpack.c.h.b16 %v620
      %v1133 = vunpack.c.l.b16 %v621
      %v1134 = vunpack.c.h.b16 %v621
      %v1135 = vunpack.c.l.b16 %v622
      %v1136 = vunpack.c.h.b16 %v622
      %v1137 = vunpack.c.l.b16 %v623
      %v1138 = vunpack.c.h.b16 %v623
      %v1139 = vunpack.c.l.b16 %v624
      %v1140 = vunpack.c.h.b16 %v624
      %v1141 = vunpack.c.l.b16 %v625
      %v1142 = vunpack.c.h.b16 %v625
      %v1143 = vunpack.c.l.b16 %v626
      %v1144 = vunpack.c.h.b16 %v626
      %v1145 = vunpack.c.l.b16 %v627
      %v1146 = vunpack.c.h.b16 %v627
      %v1147 = vunpack.c.l.b16 %v628
      %v1148 = vunpack.c.h.b16 %v628
      %v1149 = vunpack.c.l.b16 %v629
      %v1150 = vunpack.c.h.b16 %v629
      %v1151 = vunpack.c.l.b16 %v630
      %v1152 = vunpack.c.h.b16 %v630
      %v1153 = vunpack.c.l.b16 %v631
      %v1154 = vunpack.c.h.b16 %v631
      %v1155 = vunpack.c.l.b16 %v632
      %v1156 = vunpack.c.h.b16 %v632
      %v1157 = vunpack.c.l.b16 %v633
      %v1158 = vunpack.c.h.b16 %v633
      %v1159 = vunpack.c.l.b16 %v634
      %v1160 = vunpack.c.h.b16 %v634
      %v1161 = vunpack.c.l.b16 %v635
      %v1162 = vunpack.c.h.b16 %v635
      %v1163 = vunpack.c.l.b16 %v636
      %v1164 = vunpack.c.h.b16 %v636
      %v1165 = vunpack.c.l.b16 %v637
      %v1166 = vunpack.c.h.b16 %v637
      %v1167 = vunpack.c.l.b16 %v638
      %v1168 = vunpack.c.h.b16 %v638
      %v1169 = vunpack.c.l.b16 %v639
      %v1170 = vunpack.c.h.b16 %v639
      %v1171 = vunpack.c.l.b16 %v640
      %v1172 = vunpack.c.h.b16 %v640
      %v1173 = vunpack.c.l.b16 %v641
      %v1174 = vunpack.c.h.b16 %v641
      %v1175 = vunpack.c.l.b16 %v642
      %v1176 = vunpack.c.h.b16 %v642
      %v1177 = vunpack.c.l.b16 %v643
      %v1178 = vunpack.c.h.b16 %v643
      %v1179 = vunpack.c.l.b16 %v644
      %v1180 = vunpack.c.h.b16 %v644
      %v1181 = vunpack.c.l.b16 %v645
      %v1182 = vunpack.c.h.b16 %v645
      %v1183 = vunpack.c.l.b16 %v646
      %v1184 = vunpack.c.h.b16 %v646
      %v1185 = vunpack.c.l.b16 %v647
      %v1186 = vunpack.c.h.b16 %v647
      %v1187 = vunpack.c.l.b16 %v648
      %v1188 = vunpack.c.h.b16 %v648
      %v1189 = vunpack.c.l.b16 %v649
      %v1190 = vunpack.c.h.b16 %v649
      %v1191 = vunpack.c.l.b16 %v650
      %v1192 = vunpack.c.h.b16 %v650
      %v1193 = vunpack.c.l.b16 %v651
      %v1194 = vunpack.c.h.b16 %v651
      %v1195 = vunpack.c.l.b16 %v652
      %v1196 = vunpack.c.h.b16 %v652
      %v1197 = vunpack.c.l.b16 %v653
      %v1198 = vunpack.c.h.b16 %v653
      %v1199 = vunpack.c.l.b16 %v654
      %v1200 = vunpack.c.h.b16 %v654
      %v1201 = vunpack.c.l.b16 %v655
      %v1202 = vunpack.c.h.b16 %v655
      %v1203 = vunpack.c.l.b16 %v656
      %v1204 = vunpack.c.h.b16 %v656
      %v1205 = vunpack.c.l.b16 %v657
      %v1206 = vunpack.c.h.b16 %v657
      %v1207 = vunpack.c.l.b16 %v658
      %v1208 = vunpack.c.h.b16 %v658
      %v1209 = vunpack.c.l.b16 %v659
      %v1210 = vunpack.c.h.b16 %v659
      %v1211 = vunpack.c.l.b16 %v660
      %v1212 = vunpack.c.h.b16 %v660
      %v1213 = vunpack.c.l.b16 %v661
      %v1214 = vunpack.c.h.b16 %v661
      %v1215 = vunpack.c.l.b16 %v662
      %v1216 = vunpack.c.h.b16 %v662
      %v1217 = vunpack.c.l.b16 %v663
      %v1218 = vunpack.c.h.b16 %v663
      %v1219 = vunpack.c.l.b16 %v664
      %v1220 = vunpack.c.h.b16 %v664
      %v1221 = vunpack.c.l.b16 %v665
      %v1222 = vunpack.c.h.b16 %v665
      %v1223 = vunpack.c.l.b16 %v666
      %v1224 = vunpack.c.h.b16 %v666
      %v1225 = vunpack.c.l.b16 %v667
      %v1226 = vunpack.c.h.b16 %v667
      %v1227 = vunpack.c.l.b16 %v668
      %v1228 = vunpack.c.h.b16 %v668
      %v1229 = vunpack.c.l.b16 %v669
      %v1230 = vunpack.c.h.b16 %v669
      %v1231 = vunpack.c.l.b16 %v670
      %v1232 = vunpack.c.h.b16 %v670
      %v1233 = vunpack.c.l.b16 %v671
      %v1234 = vunpack.c.h.b16 %v671
      %v1235 = vunpack.c.l.b16 %v672
      %v1236 = vunpack.c.h.b16 %v672
      %v1237 = vunpack.c.l.b16 %v673
      %v1238 = vunpack.c.h.b16 %v673
      %v1239 = vunpack.c.l.b16 %v674
      %v1240 = vunpack.c.h.b16 %v674
      %v1241 = vunpack.c.l.b16 %v675
      %v1242 = vunpack.c.h.b16 %v675
      %v1243 = vunpack.c.l.b16 %v676
      %v1244 = vunpack.c.h.b16 %v676
      %v1245 = vunpack.c.l.b16 %v677
      %v1246 = vunpack.c.h.b16 %v677
      %v1247 = vunpack.c.l.b16 %v678
      %v1248 = vunpack.c.h.b16 %v678
      %v1249 = vunpack.c.l.b16 %v679
      %v1250 = vunpack.c.h.b16 %v679
      %v1251 = vunpack.c.l.b16 %v680
      %v1252 = vunpack.c.h.b16 %v680
      %v1253 = vunpack.c.l.b16 %v681
      %v1254 = vunpack.c.h.b16 %v681
      %v1255 = vunpack.c.l.b16 %v682
      %v1256 = vunpack.c.h.b16 %v682
      %v1257 = vunpack.c.l.b16 %v683
      %v1258 = vunpack.c.h.b16 %v683
      %v1259 = vunpack.c.l.b16 %v684
      %v1260 = vunpack.c.h.b16 %v684
      %v1261 = vpack.c.b16 %v881, %v877
      %v1262 = vpack.c.b16 %v882, %v878
      %v1263 = vpack.c.b16 %v883, %v879
      %v1264 = vpack.c.b16 %v884, %v880
      %v1265 = vpack.c.b16 %v889, %v885
      %v1266 = vpack.c.b16 %v890, %v886
      %v1267 = vpack.c.b16 %v891, %v887
      %v1268 = vpack.c.b16 %v892, %v888
      %v1269 = vpack.c.b16 %v897, %v893
      %v1270 = vpack.c.b16 %v898, %v894
      %v1271 = vpack.c.b16 %v899, %v895
      %v1272 = vpack.c.b16 %v900, %v896
      %v1273 = vpack.c.b16 %v905, %v901
      %v1274 = vpack.c.b16 %v906, %v902
      %v1275 = vpack.c.b16 %v907, %v903
      %v1276 = vpack.c.b16 %v908, %v904
      %v1277 = vpack.c.b16 %v913, %v909
      %v1278 = vpack.c.b16 %v914, %v910
      %v1279 = vpack.c.b16 %v915, %v911
      %v1280 = vpack.c.b16 %v916, %v912
      %v1281 = vpack.c.b16 %v921, %v917
      %v1282 = vpack.c.b16 %v922, %v918
      %v1283 = vpack.c.b16 %v923, %v919
      %v1284 = vpack.c.b16 %v924, %v920
      %v1285 = vpack.c.b16 %v929, %v925
      %v1286 = vpack.c.b16 %v930, %v926
      %v1287 = vpack.c.b16 %v931, %v927
      %v1288 = vpack.c.b16 %v932, %v928
      %v1289 = vpack.c.b16 %v937, %v933
      %v1290 = vpack.c.b16 %v938, %v934
      %v1291 = vpack.c.b16 %v939, %v935
      %v1292 = vpack.c.b16 %v940, %v936
      %v1293 = vpack.c.b16 %v945, %v941
      %v1294 = vpack.c.b16 %v946, %v942
      %v1295 = vpack.c.b16 %v947, %v943
      %v1296 = vpack.c.b16 %v948, %v944
      %v1297 = vpack.c.b16 %v953, %v949
      %v1298 = vpack.c.b16 %v954, %v950
      %v1299 = vpack.c.b16 %v955, %v951
      %v1300 = vpack.c.b16 %v956, %v952
      %v1301 = vpack.c.b16 %v961, %v957
      %v1302 = vpack.c.b16 %v962, %v958
      %v1303 = vpack.c.b16 %v963, %v959
      %v1304 = vpack.c.b16 %v964, %v960
      %v1305 = vpack.c.b16 %v969, %v965
      %v1306 = vpack.c.b16 %v970, %v966
      %v1307 = vpack.c.b16 %v971, %v967
      %v1308 = vpack.c.b16 %v972, %v968
      %v1309 = vpack.c.b16 %v977, %v973
      %v1310 = vpack.c.b16 %v978, %v974
      %v1311 = vpack.c.b16 %v979, %v975
      %v1312 = vpack.c.b16 %v980, %v976
      %v1313 = vpack.c.b16 %v985, %v981
      %v1314 = vpack.c.b16 %v986, %v982
      %v1315 = vpack.c.b16 %v987, %v983
      %v1316 = vpack.c.b16 %v988, %v984
      %v1317 = vpack.c.b16 %v993, %v989
      %v1318 = vpack.c.b16 %v994, %v990
      %v1319 = vpack.c.b16 %v995, %v991
      %v1320 = vpack.c.b16 %v996, %v992
      %v1321 = vpack.c.b16 %v1001, %v997
      %v1322 = vpack.c.b16 %v1002, %v998
      %v1323 = vpack.c.b16 %v1003, %v999
      %v1324 = vpack.c.b16 %v1004, %v1000
      %v1325 = vpack.c.b16 %v1009, %v1005
      %v1326 = vpack.c.b16 %v1010, %v1006
      %v1327 = vpack.c.b16 %v1011, %v1007
      %v1328 = vpack.c.b16 %v1012, %v1008
      %v1329 = vpack.c.b16 %v1017, %v1013
      %v1330 = vpack.c.b16 %v1018, %v1014
      %v1331 = vpack.c.b16 %v1019, %v1015
      %v1332 = vpack.c.b16 %v1020, %v1016
      %v1333 = vpack.c.b16 %v1025, %v1021
      %v1334 = vpack.c.b16 %v1026, %v1022
      %v1335 = vpack.c.b16 %v1027, %v1023
      %v1336 = vpack.c.b16 %v1028, %v1024
      %v1337 = vpack.c.b16 %v1033, %v1029
      %v1338 = vpack.c.b16 %v1034, %v1030
      %v1339 = vpack.c.b16 %v1035, %v1031
      %v1340 = vpack.c.b16 %v1036, %v1032
      %v1341 = vpack.c.b16 %v1041, %v1037
      %v1342 = vpack.c.b16 %v1042, %v1038
      %v1343 = vpack.c.b16 %v1043, %v1039
      %v1344 = vpack.c.b16 %v1044, %v1040
      %v1345 = vpack.c.b16 %v1049, %v1045
      %v1346 = vpack.c.b16 %v1050, %v1046
      %v1347 = vpack.c.b16 %v1051, %v1047
      %v1348 = vpack.c.b16 %v1052, %v1048
      %v1349 = vpack.c.b16 %v1057, %v1053
      %v1350 = vpack.c.b16 %v1058, %v1054
      %v1351 = vpack.c.b16 %v1059, %v1055
      %v1352 = vpack.c.b16 %v1060, %v1056
      %v1353 = vpack.c.b16 %v1065, %v1061
      %v1354 = vpack.c.b16 %v1066, %v1062
      %v1355 = vpack.c.b16 %v1067, %v1063
      %v1356 = vpack.c.b16 %v1068, %v1064
      %v1357 = vpack.c.b16 %v1073, %v1069
      %v1358 = vpack.c.b16 %v1074, %v1070
      %v1359 = vpack.c.b16 %v1075, %v1071
      %v1360 = vpack.c.b16 %v1076, %v1072
      %v1361 = vpack.c.b16 %v1081, %v1077
      %v1362 = vpack.c.b16 %v1082, %v1078
      %v1363 = vpack.c.b16 %v1083, %v1079
      %v1364 = vpack.c.b16 %v1084, %v1080
      %v1365 = vpack.c.b16 %v1089, %v1085
      %v1366 = vpack.c.b16 %v1090, %v1086
      %v1367 = vpack.c.b16 %v1091, %v1087
      %v1368 = vpack.c.b16 %v1092, %v1088
      %v1369 = vpack.c.b16 %v1097, %v1093
      %v1370 = vpack.c.b16 %v1098, %v1094
      %v1371 = vpack.c.b16 %v1099, %v1095
      %v1372 = vpack.c.b16 %v1100, %v1096
      %v1373 = vpack.c.b16 %v1105, %v1101
      %v1374 = vpack.c.b16 %v1106, %v1102
      %v1375 = vpack.c.b16 %v1107, %v1103
      %v1376 = vpack.c.b16 %v1108, %v1104
      %v1377 = vpack.c.b16 %v1113, %v1109
      %v1378 = vpack.c.b16 %v1114, %v1110
      %v1379 = vpack.c.b16 %v1115, %v1111
      %v1380 = vpack.c.b16 %v1116, %v1112
      %v1381 = vpack.c.b16 %v1121, %v1117
      %v1382 = vpack.c.b16 %v1122, %v1118
      %v1383 = vpack.c.b16 %v1123, %v1119
      %v1384 = vpack.c.b16 %v1124, %v1120
      %v1385 = vpack.c.b16 %v1129, %v1125
      %v1386 = vpack.c.b16 %v1130, %v1126
      %v1387 = vpack.c.b16 %v1131, %v1127
      %v1388 = vpack.c.b16 %v1132, %v1128
      %v1389 = vpack.c.b16 %v1137, %v1133
      %v1390 = vpack.c.b16 %v1138, %v1134
      %v1391 = vpack.c.b16 %v1139, %v1135
      %v1392 = vpack.c.b16 %v1140, %v1136
      %v1393 = vpack.c.b16 %v1145, %v1141
      %v1394 = vpack.c.b16 %v1146, %v1142
      %v1395 = vpack.c.b16 %v1147, %v1143
      %v1396 = vpack.c.b16 %v1148, %v1144
      %v1397 = vpack.c.b16 %v1153, %v1149
      %v1398 = vpack.c.b16 %v1154, %v1150
      %v1399 = vpack.c.b16 %v1155, %v1151
      %v1400 = vpack.c.b16 %v1156, %v1152
      %v1401 = vpack.c.b16 %v1161, %v1157
      %v1402 = vpack.c.b16 %v1162, %v1158
      %v1403 = vpack.c.b16 %v1163, %v1159
      %v1404 = vpack.c.b16 %v1164, %v1160
      %v1405 = vpack.c.b16 %v1169, %v1165
      %v1406 = vpack.c.b16 %v1170, %v1166
      %v1407 = vpack.c.b16 %v1171, %v1167
      %v1408 = vpack.c.b16 %v1172, %v1168
      %v1409 = vpack.c.b16 %v1177, %v1173
      %v1410 = vpack.c.b16 %v1178, %v1174
      %v1411 = vpack.c.b16 %v1179, %v1175
      %v1412 = vpack.c.b16 %v1180, %v1176
      %v1413 = vpack.c.b16 %v1185, %v1181
      %v1414 = vpack.c.b16 %v1186, %v1182
      %v1415 = vpack.c.b16 %v1187, %v1183
      %v1416 = vpack.c.b16 %v1188, %v1184
      %v1417 = vpack.c.b16 %v1193, %v1189
      %v1418 = vpack.c.b16 %v1194, %v1190
      %v1419 = vpack.c.b16 %v1195, %v1191
      %v1420 = vpack.c.b16 %v1196, %v1192
      %v1421 = vpack.c.b16 %v1201, %v1197
      %v1422 = vpack.c.b16 %v1202, %v1198
      %v1423 = vpack.c.b16 %v1203, %v1199
      %v1424 = vpack.c.b16 %v1204, %v1200
      %v1425 = vpack.c.b16 %v1209, %v1205
      %v1426 = vpack.c.b16 %v1210, %v1206
      %v1427 = vpack.c.b16 %v1211, %v1207
      %v1428 = vpack.c.b16 %v1212, %v1208
      %v1429 = vpack.c.b16 %v1217, %v1213
      %v1430 = vpack.c.b16 %v1218, %v1214
      %v1431 = vpack.c.b16 %v1219, %v1215
      %v1432 = vpack.c.b16 %v1220, %v1216
      %v1433 = vpack.c.b16 %v1225, %v1221
      %v1434 = vpack.c.b16 %v1226, %v1222
      %v1435 = vpack.c.b16 %v1227, %v1223
      %v1436 = vpack.c.b16 %v1228, %v1224
      %v1437 = vpack.c.b16 %v1233, %v1229
      %v1438 = vpack.c.b16 %v1234, %v1230
      %v1439 = vpack.c.b16 %v1235, %v1231
      %v1440 = vpack.c.b16 %v1236, %v1232
      %v1441 = vpack.c.b16 %v1241, %v1237
      %v1442 = vpack.c.b16 %v1242, %v1238
      %v1443 = vpack.c.b16 %v1243, %v1239
      %v1444 = vpack.c.b16 %v1244, %v1240
      %v1445 = vpack.c.b16 %v1249, %v1245
      %v1446 = vpack.c.b16 %v1250, %v1246
      %v1447 = vpack.c.b16 %v1251, %v1247
      %v1448 = vpack.c.b16 %v1252, %v1248
      %v1449 = vpack.c.b16 %v1257, %v1253
      %v1450 = vpack.c.b16 %v1258, %v1254
      %v1451 = vpack.c.b16 %v1259, %v1255
      %v1452 = vpack.c.b16 %v1260, %v1256
      %1645 = vmatpush.bf16.msra.mxu0 %v1289
      %1646 = vmatpush.bf16.msra.mxu0 %v1285
      %1647 = vmatpush.bf16.msra.mxu0 %v1281
      %1648 = vmatpush.bf16.msra.mxu0 %v1277
      %1649 = vmatpush.bf16.msra.mxu0 %v1273
      %1650 = vmatpush.bf16.msra.mxu0 %v1269
      %1651 = vmatpush.bf16.msra.mxu0 %v1265
      %1652 = vmatpush.bf16.msra.mxu0 %v1261
      %1653 = vmatmul.bf16.gmra.mxu0 %v294
      %v1654 = vpop.f32.mrf.mxu0
      %v1655 = vadd.f32 0.0, %v1654
      %v1656 = vpop.f32.mrf.mxu0
      %1657 = vdwg.mxu0
      %1658 = vmatpush.bf16.msra.mxu0 %v1321
      %1659 = vmatpush.bf16.msra.mxu0 %v1317
      %1660 = vmatpush.bf16.msra.mxu0 %v1313
      %1661 = vmatpush.bf16.msra.mxu0 %v1309
      %1662 = vmatpush.bf16.msra.mxu0 %v1305
      %1663 = vmatpush.bf16.msra.mxu0 %v1301
      %1664 = vmatpush.bf16.msra.mxu0 %v1297
      %1665 = vmatpush.bf16.msra.mxu0 %v1293
      %1666 = vmatmul.bf16.gmra.mxu0 %v295
      %v1667 = vpop.f32.mrf.mxu0
      %v1668 = vadd.f32 %v1655, %v1667
      %v1669 = vpop.f32.mrf.mxu0
      %1670 = vdwg.mxu0
      %1671 = vmatpush.bf16.msra.mxu0 %v1353
      %1672 = vmatpush.bf16.msra.mxu0 %v1349
      %1673 = vmatpush.bf16.msra.mxu0 %v1345
      %1674 = vmatpush.bf16.msra.mxu0 %v1341
      %1675 = vmatpush.bf16.msra.mxu0 %v1337
      %1676 = vmatpush.bf16.msra.mxu0 %v1333
      %1677 = vmatpush.bf16.msra.mxu0 %v1329
      %1678 = vmatpush.bf16.msra.mxu0 %v1325
      %1679 = vmatmul.bf16.gmra.mxu0 %v296
      %v1680 = vpop.f32.mrf.mxu0
      %v1681 = vadd.f32 %v1668, %v1680
      %v1682 = vpop.f32.mrf.mxu0
      %1683 = vdwg.mxu0
      %1684 = vmatpush.bf16.msra.mxu0 %v1385
      %1685 = vmatpush.bf16.msra.mxu0 %v1381
      %1686 = vmatpush.bf16.msra.mxu0 %v1377
      %1687 = vmatpush.bf16.msra.mxu0 %v1373
      %1688 = vmatpush.bf16.msra.mxu0 %v1369
      %1689 = vmatpush.bf16.msra.mxu0 %v1365
      %1690 = vmatpush.bf16.msra.mxu0 %v1361
      %1691 = vmatpush.bf16.msra.mxu0 %v1357
      %1692 = vmatmul.bf16.gmra.mxu0 %v297
      %v1693 = vpop.f32.mrf.mxu0
      %v1694 = vadd.f32 %v1681, %v1693
      %v1695 = vpop.f32.mrf.mxu0
      %1696 = vdwg.mxu0
      %1697 = vmatpush.bf16.msra.mxu0 %v1417
      %1698 = vmatpush.bf16.msra.mxu0 %v1413
      %1699 = vmatpush.bf16.msra.mxu0 %v1409
      %1700 = vmatpush.bf16.msra.mxu0 %v1405
      %1701 = vmatpush.bf16.msra.mxu0 %v1401
      %1702 = vmatpush.bf16.msra.mxu0 %v1397
      %1703 = vmatpush.bf16.msra.mxu0 %v1393
      %1704 = vmatpush.bf16.msra.mxu0 %v1389
      %1705 = vmatmul.bf16.gmra.mxu0 %v298
      %v1706 = vpop.f32.mrf.mxu0
      %v1707 = vadd.f32 %v1694, %v1706
      %v1708 = vpop.f32.mrf.mxu0
      %1709 = vdwg.mxu0
      %1710 = vmatpush.bf16.msra.mxu0 %v1449
      %1711 = vmatpush.bf16.msra.mxu0 %v1445
      %1712 = vmatpush.bf16.msra.mxu0 %v1441
      %1713 = vmatpush.bf16.msra.mxu0 %v1437
      %1714 = vmatpush.bf16.msra.mxu0 %v1433
      %1715 = vmatpush.bf16.msra.mxu0 %v1429
      %1716 = vmatpush.bf16.msra.mxu0 %v1425
      %1717 = vmatpush.bf16.msra.mxu0 %v1421
      %1718 = vmatmul.bf16.gmra.mxu0 %v299
      %v1719 = vpop.f32.mrf.mxu0
      %v1720 = vadd.f32 %v1707, %v1719
      %v1721 = vpop.f32.mrf.mxu0
      %1722 = vdwg.mxu0
      %1723 = vmatpush.bf16.msra.mxu0 %v1290
      %1724 = vmatpush.bf16.msra.mxu0 %v1286
      %1725 = vmatpush.bf16.msra.mxu0 %v1282
      %1726 = vmatpush.bf16.msra.mxu0 %v1278
      %1727 = vmatpush.bf16.msra.mxu0 %v1274
      %1728 = vmatpush.bf16.msra.mxu0 %v1270
      %1729 = vmatpush.bf16.msra.mxu0 %v1266
      %1730 = vmatpush.bf16.msra.mxu0 %v1262
      %1731 = vmatmul.bf16.gmra.mxu0 %v294
      %v1732 = vpop.f32.mrf.mxu0
      %v1733 = vadd.f32 0.0, %v1732
      %v1734 = vpop.f32.mrf.mxu0
      %1735 = vdwg.mxu0
      %1736 = vmatpush.bf16.msra.mxu0 %v1322
      %1737 = vmatpush.bf16.msra.mxu0 %v1318
      %1738 = vmatpush.bf16.msra.mxu0 %v1314
      %1739 = vmatpush.bf16.msra.mxu0 %v1310
      %1740 = vmatpush.bf16.msra.mxu0 %v1306
      %1741 = vmatpush.bf16.msra.mxu0 %v1302
      %1742 = vmatpush.bf16.msra.mxu0 %v1298
      %1743 = vmatpush.bf16.msra.mxu0 %v1294
      %1744 = vmatmul.bf16.gmra.mxu0 %v295
      %v1745 = vpop.f32.mrf.mxu0
      %v1746 = vadd.f32 %v1733, %v1745
      %v1747 = vpop.f32.mrf.mxu0
      %1748 = vdwg.mxu0
      %1749 = vmatpush.bf16.msra.mxu0 %v1354
      %1750 = vmatpush.bf16.msra.mxu0 %v1350
      %1751 = vmatpush.bf16.msra.mxu0 %v1346
      %1752 = vmatpush.bf16.msra.mxu0 %v1342
      %1753 = vmatpush.bf16.msra.mxu0 %v1338
      %1754 = vmatpush.bf16.msra.mxu0 %v1334
      %1755 = vmatpush.bf16.msra.mxu0 %v1330
      %1756 = vmatpush.bf16.msra.mxu0 %v1326
      %1757 = vmatmul.bf16.gmra.mxu0 %v296
      %v1758 = vpop.f32.mrf.mxu0
      %v1759 = vadd.f32 %v1746, %v1758
      %v1760 = vpop.f32.mrf.mxu0
      %1761 = vdwg.mxu0
      %1762 = vmatpush.bf16.msra.mxu0 %v1386
      %1763 = vmatpush.bf16.msra.mxu0 %v1382
      %1764 = vmatpush.bf16.msra.mxu0 %v1378
      %1765 = vmatpush.bf16.msra.mxu0 %v1374
      %1766 = vmatpush.bf16.msra.mxu0 %v1370
      %1767 = vmatpush.bf16.msra.mxu0 %v1366
      %1768 = vmatpush.bf16.msra.mxu0 %v1362
      %1769 = vmatpush.bf16.msra.mxu0 %v1358
      %1770 = vmatmul.bf16.gmra.mxu0 %v297
      %v1771 = vpop.f32.mrf.mxu0
      %v1772 = vadd.f32 %v1759, %v1771
      %v1773 = vpop.f32.mrf.mxu0
      %1774 = vdwg.mxu0
      %1775 = vmatpush.bf16.msra.mxu0 %v1418
      %1776 = vmatpush.bf16.msra.mxu0 %v1414
      %1777 = vmatpush.bf16.msra.mxu0 %v1410
      %1778 = vmatpush.bf16.msra.mxu0 %v1406
      %1779 = vmatpush.bf16.msra.mxu0 %v1402
      %1780 = vmatpush.bf16.msra.mxu0 %v1398
      %1781 = vmatpush.bf16.msra.mxu0 %v1394
      %1782 = vmatpush.bf16.msra.mxu0 %v1390
      %1783 = vmatmul.bf16.gmra.mxu0 %v298
      %v1784 = vpop.f32.mrf.mxu0
      %v1785 = vadd.f32 %v1772, %v1784
      %v1786 = vpop.f32.mrf.mxu0
      %1787 = vdwg.mxu0
      %1788 = vmatpush.bf16.msra.mxu0 %v1450
      %1789 = vmatpush.bf16.msra.mxu0 %v1446
      %1790 = vmatpush.bf16.msra.mxu0 %v1442
      %1791 = vmatpush.bf16.msra.mxu0 %v1438
      %1792 = vmatpush.bf16.msra.mxu0 %v1434
      %1793 = vmatpush.bf16.msra.mxu0 %v1430
      %1794 = vmatpush.bf16.msra.mxu0 %v1426
      %1795 = vmatpush.bf16.msra.mxu0 %v1422
      %1796 = vmatmul.bf16.gmra.mxu0 %v299
      %v1797 = vpop.f32.mrf.mxu0
      %v1798 = vadd.f32 %v1785, %v1797
      %v1799 = vpop.f32.mrf.mxu0
      %1800 = vdwg.mxu0
      %1801 = vmatpush.bf16.msra.mxu0 %v1291
      %1802 = vmatpush.bf16.msra.mxu0 %v1287
      %1803 = vmatpush.bf16.msra.mxu0 %v1283
      %1804 = vmatpush.bf16.msra.mxu0 %v1279
      %1805 = vmatpush.bf16.msra.mxu0 %v1275
      %1806 = vmatpush.bf16.msra.mxu0 %v1271
      %1807 = vmatpush.bf16.msra.mxu0 %v1267
      %1808 = vmatpush.bf16.msra.mxu0 %v1263
      %1809 = vmatmul.bf16.gmra.mxu0 %v294
      %v1810 = vpop.f32.mrf.mxu0
      %v1811 = vadd.f32 0.0, %v1810
      %v1812 = vpop.f32.mrf.mxu0
      %1813 = vdwg.mxu0
      %1814 = vmatpush.bf16.msra.mxu0 %v1323
      %1815 = vmatpush.bf16.msra.mxu0 %v1319
      %1816 = vmatpush.bf16.msra.mxu0 %v1315
      %1817 = vmatpush.bf16.msra.mxu0 %v1311
      %1818 = vmatpush.bf16.msra.mxu0 %v1307
      %1819 = vmatpush.bf16.msra.mxu0 %v1303
      %1820 = vmatpush.bf16.msra.mxu0 %v1299
      %1821 = vmatpush.bf16.msra.mxu0 %v1295
      %1822 = vmatmul.bf16.gmra.mxu0 %v295
      %v1823 = vpop.f32.mrf.mxu0
      %v1824 = vadd.f32 %v1811, %v1823
      %v1825 = vpop.f32.mrf.mxu0
      %1826 = vdwg.mxu0
      %1827 = vmatpush.bf16.msra.mxu0 %v1355
      %1828 = vmatpush.bf16.msra.mxu0 %v1351
      %1829 = vmatpush.bf16.msra.mxu0 %v1347
      %1830 = vmatpush.bf16.msra.mxu0 %v1343
      %1831 = vmatpush.bf16.msra.mxu0 %v1339
      %1832 = vmatpush.bf16.msra.mxu0 %v1335
      %1833 = vmatpush.bf16.msra.mxu0 %v1331
      %1834 = vmatpush.bf16.msra.mxu0 %v1327
      %1835 = vmatmul.bf16.gmra.mxu0 %v296
      %v1836 = vpop.f32.mrf.mxu0
      %v1837 = vadd.f32 %v1824, %v1836
      %v1838 = vpop.f32.mrf.mxu0
      %1839 = vdwg.mxu0
      %1840 = vmatpush.bf16.msra.mxu0 %v1387
      %1841 = vmatpush.bf16.msra.mxu0 %v1383
      %1842 = vmatpush.bf16.msra.mxu0 %v1379
      %1843 = vmatpush.bf16.msra.mxu0 %v1375
      %1844 = vmatpush.bf16.msra.mxu0 %v1371
      %1845 = vmatpush.bf16.msra.mxu0 %v1367
      %1846 = vmatpush.bf16.msra.mxu0 %v1363
      %1847 = vmatpush.bf16.msra.mxu0 %v1359
      %1848 = vmatmul.bf16.gmra.mxu0 %v297
      %v1849 = vpop.f32.mrf.mxu0
      %v1850 = vadd.f32 %v1837, %v1849
      %v1851 = vpop.f32.mrf.mxu0
      %1852 = vdwg.mxu0
      %1853 = vmatpush.bf16.msra.mxu0 %v1419
      %1854 = vmatpush.bf16.msra.mxu0 %v1415
      %1855 = vmatpush.bf16.msra.mxu0 %v1411
      %1856 = vmatpush.bf16.msra.mxu0 %v1407
      %1857 = vmatpush.bf16.msra.mxu0 %v1403
      %1858 = vmatpush.bf16.msra.mxu0 %v1399
      %1859 = vmatpush.bf16.msra.mxu0 %v1395
      %1860 = vmatpush.bf16.msra.mxu0 %v1391
      %1861 = vmatmul.bf16.gmra.mxu0 %v298
      %v1862 = vpop.f32.mrf.mxu0
      %v1863 = vadd.f32 %v1850, %v1862
      %v1864 = vpop.f32.mrf.mxu0
      %1865 = vdwg.mxu0
      %1866 = vmatpush.bf16.msra.mxu0 %v1451
      %1867 = vmatpush.bf16.msra.mxu0 %v1447
      %1868 = vmatpush.bf16.msra.mxu0 %v1443
      %1869 = vmatpush.bf16.msra.mxu0 %v1439
      %1870 = vmatpush.bf16.msra.mxu0 %v1435
      %1871 = vmatpush.bf16.msra.mxu0 %v1431
      %1872 = vmatpush.bf16.msra.mxu0 %v1427
      %1873 = vmatpush.bf16.msra.mxu0 %v1423
      %1874 = vmatmul.bf16.gmra.mxu0 %v299
      %v1875 = vpop.f32.mrf.mxu0
      %v1876 = vadd.f32 %v1863, %v1875
      %v1877 = vpop.f32.mrf.mxu0
      %1878 = vdwg.mxu0
      %1879 = vmatpush.bf16.msra.mxu0 %v1292
      %1880 = vmatpush.bf16.msra.mxu0 %v1288
      %1881 = vmatpush.bf16.msra.mxu0 %v1284
      %1882 = vmatpush.bf16.msra.mxu0 %v1280
      %1883 = vmatpush.bf16.msra.mxu0 %v1276
      %1884 = vmatpush.bf16.msra.mxu0 %v1272
      %1885 = vmatpush.bf16.msra.mxu0 %v1268
      %1886 = vmatpush.bf16.msra.mxu0 %v1264
      %1887 = vmatmul.bf16.gmra.mxu0 %v294
      %v1888 = vpop.f32.mrf.mxu0
      %v1889 = vadd.f32 0.0, %v1888
      %v1890 = vpop.f32.mrf.mxu0
      %1891 = vdwg.mxu0
      %1892 = vmatpush.bf16.msra.mxu0 %v1324
      %1893 = vmatpush.bf16.msra.mxu0 %v1320
      %1894 = vmatpush.bf16.msra.mxu0 %v1316
      %1895 = vmatpush.bf16.msra.mxu0 %v1312
      %1896 = vmatpush.bf16.msra.mxu0 %v1308
      %1897 = vmatpush.bf16.msra.mxu0 %v1304
      %1898 = vmatpush.bf16.msra.mxu0 %v1300
      %1899 = vmatpush.bf16.msra.mxu0 %v1296
      %1900 = vmatmul.bf16.gmra.mxu0 %v295
      %v1901 = vpop.f32.mrf.mxu0
      %v1902 = vadd.f32 %v1889, %v1901
      %v1903 = vpop.f32.mrf.mxu0
      %1904 = vdwg.mxu0
      %1905 = vmatpush.bf16.msra.mxu0 %v1356
      %1906 = vmatpush.bf16.msra.mxu0 %v1352
      %1907 = vmatpush.bf16.msra.mxu0 %v1348
      %1908 = vmatpush.bf16.msra.mxu0 %v1344
      %1909 = vmatpush.bf16.msra.mxu0 %v1340
      %1910 = vmatpush.bf16.msra.mxu0 %v1336
      %1911 = vmatpush.bf16.msra.mxu0 %v1332
      %1912 = vmatpush.bf16.msra.mxu0 %v1328
      %1913 = vmatmul.bf16.gmra.mxu0 %v296
      %v1914 = vpop.f32.mrf.mxu0
      %v1915 = vadd.f32 %v1902, %v1914
      %v1916 = vpop.f32.mrf.mxu0
      %1917 = vdwg.mxu0
      %1918 = vmatpush.bf16.msra.mxu0 %v1388
      %1919 = vmatpush.bf16.msra.mxu0 %v1384
      %1920 = vmatpush.bf16.msra.mxu0 %v1380
      %1921 = vmatpush.bf16.msra.mxu0 %v1376
      %1922 = vmatpush.bf16.msra.mxu0 %v1372
      %1923 = vmatpush.bf16.msra.mxu0 %v1368
      %1924 = vmatpush.bf16.msra.mxu0 %v1364
      %1925 = vmatpush.bf16.msra.mxu0 %v1360
      %1926 = vmatmul.bf16.gmra.mxu0 %v297
      %v1927 = vpop.f32.mrf.mxu0
      %v1928 = vadd.f32 %v1915, %v1927
      %v1929 = vpop.f32.mrf.mxu0
      %1930 = vdwg.mxu0
      %1931 = vmatpush.bf16.msra.mxu0 %v1420
      %1932 = vmatpush.bf16.msra.mxu0 %v1416
      %1933 = vmatpush.bf16.msra.mxu0 %v1412
      %1934 = vmatpush.bf16.msra.mxu0 %v1408
      %1935 = vmatpush.bf16.msra.mxu0 %v1404
      %1936 = vmatpush.bf16.msra.mxu0 %v1400
      %1937 = vmatpush.bf16.msra.mxu0 %v1396
      %1938 = vmatpush.bf16.msra.mxu0 %v1392
      %1939 = vmatmul.bf16.gmra.mxu0 %v298
      %v1940 = vpop.f32.mrf.mxu0
      %v1941 = vadd.f32 %v1928, %v1940
      %v1942 = vpop.f32.mrf.mxu0
      %1943 = vdwg.mxu0
      %1944 = vmatpush.bf16.msra.mxu0 %v1452
      %1945 = vmatpush.bf16.msra.mxu0 %v1448
      %1946 = vmatpush.bf16.msra.mxu0 %v1444
      %1947 = vmatpush.bf16.msra.mxu0 %v1440
      %1948 = vmatpush.bf16.msra.mxu0 %v1436
      %1949 = vmatpush.bf16.msra.mxu0 %v1432
      %1950 = vmatpush.bf16.msra.mxu0 %v1428
      %1951 = vmatpush.bf16.msra.mxu0 %v1424
      %1952 = vmatmul.bf16.gmra.mxu0 %v299
      %v1953 = vpop.f32.mrf.mxu0
      %v1954 = vadd.f32 %v1941, %v1953
      %v1955 = vpop.f32.mrf.mxu0
      %1956 = vdwg.mxu0
      %1958 = vst [vmem:[#allocation1] ss:$9 sm:$0xff] %v300
      %v1959 = vld [vmem:[#allocation1] sm:$0xff]
      %v1960 = vld [vmem:[#allocation1 + $0x9] sm:$0xff]
      %v1961 = vld [vmem:[#allocation1 + $0x12] sm:$0xff]
      %v1962 = vld [vmem:[#allocation1 + $0x1b] sm:$0xff]
      %v1963 = vld [vmem:[#allocation1 + $0x24] sm:$0xff]
      %v1964 = vld [vmem:[#allocation1 + $0x2d] sm:$0xff]
      %v2163 = vunpack.c.l.b16 %v301
      %v2164 = vunpack.c.h.b16 %v301
      %v2165 = vunpack.c.l.b16 %v302
      %v2166 = vunpack.c.h.b16 %v302
      %v2167 = vunpack.c.l.b16 %v303
      %v2168 = vunpack.c.h.b16 %v303
      %v2169 = vunpack.c.l.b16 %v304
      %v2170 = vunpack.c.h.b16 %v304
      %v2171 = vunpack.c.l.b16 %v305
      %v2172 = vunpack.c.h.b16 %v305
      %v2173 = vunpack.c.l.b16 %v306
      %v2174 = vunpack.c.h.b16 %v306
      %v2175 = vunpack.c.l.b16 %v307
      %v2176 = vunpack.c.h.b16 %v307
      %v2177 = vunpack.c.l.b16 %v308
      %v2178 = vunpack.c.h.b16 %v308
      %v2179 = vunpack.c.l.b16 %v309
      %v2180 = vunpack.c.h.b16 %v309
      %v2181 = vunpack.c.l.b16 %v310
      %v2182 = vunpack.c.h.b16 %v310
      %v2183 = vunpack.c.l.b16 %v311
      %v2184 = vunpack.c.h.b16 %v311
      %v2185 = vunpack.c.l.b16 %v312
      %v2186 = vunpack.c.h.b16 %v312
      %v2187 = vunpack.c.l.b16 %v313
      %v2188 = vunpack.c.h.b16 %v313
      %v2189 = vunpack.c.l.b16 %v314
      %v2190 = vunpack.c.h.b16 %v314
      %v2191 = vunpack.c.l.b16 %v315
      %v2192 = vunpack.c.h.b16 %v315
      %v2193 = vunpack.c.l.b16 %v316
      %v2194 = vunpack.c.h.b16 %v316
      %v2195 = vunpack.c.l.b16 %v317
      %v2196 = vunpack.c.h.b16 %v317
      %v2197 = vunpack.c.l.b16 %v318
      %v2198 = vunpack.c.h.b16 %v318
      %v2199 = vunpack.c.l.b16 %v319
      %v2200 = vunpack.c.h.b16 %v319
      %v2201 = vunpack.c.l.b16 %v320
      %v2202 = vunpack.c.h.b16 %v320
      %v2203 = vunpack.c.l.b16 %v321
      %v2204 = vunpack.c.h.b16 %v321
      %v2205 = vunpack.c.l.b16 %v322
      %v2206 = vunpack.c.h.b16 %v322
      %v2207 = vunpack.c.l.b16 %v323
      %v2208 = vunpack.c.h.b16 %v323
      %v2209 = vunpack.c.l.b16 %v324
      %v2210 = vunpack.c.h.b16 %v324
      %v2211 = vunpack.c.l.b16 %v325
      %v2212 = vunpack.c.h.b16 %v325
      %v2213 = vunpack.c.l.b16 %v326
      %v2214 = vunpack.c.h.b16 %v326
      %v2215 = vunpack.c.l.b16 %v327
      %v2216 = vunpack.c.h.b16 %v327
      %v2217 = vunpack.c.l.b16 %v328
      %v2218 = vunpack.c.h.b16 %v328
      %v2219 = vunpack.c.l.b16 %v329
      %v2220 = vunpack.c.h.b16 %v329
      %v2221 = vunpack.c.l.b16 %v330
      %v2222 = vunpack.c.h.b16 %v330
      %v2223 = vunpack.c.l.b16 %v331
      %v2224 = vunpack.c.h.b16 %v331
      %v2225 = vunpack.c.l.b16 %v332
      %v2226 = vunpack.c.h.b16 %v332
      %v2227 = vunpack.c.l.b16 %v333
      %v2228 = vunpack.c.h.b16 %v333
      %v2229 = vunpack.c.l.b16 %v334
      %v2230 = vunpack.c.h.b16 %v334
      %v2231 = vunpack.c.l.b16 %v335
      %v2232 = vunpack.c.h.b16 %v335
      %v2233 = vunpack.c.l.b16 %v336
      %v2234 = vunpack.c.h.b16 %v336
      %v2235 = vunpack.c.l.b16 %v337
      %v2236 = vunpack.c.h.b16 %v337
      %v2237 = vunpack.c.l.b16 %v338
      %v2238 = vunpack.c.h.b16 %v338
      %v2239 = vunpack.c.l.b16 %v339
      %v2240 = vunpack.c.h.b16 %v339
      %v2241 = vunpack.c.l.b16 %v340
      %v2242 = vunpack.c.h.b16 %v340
      %v2243 = vunpack.c.l.b16 %v341
      %v2244 = vunpack.c.h.b16 %v341
      %v2245 = vunpack.c.l.b16 %v342
      %v2246 = vunpack.c.h.b16 %v342
      %v2247 = vunpack.c.l.b16 %v343
      %v2248 = vunpack.c.h.b16 %v343
      %v2249 = vunpack.c.l.b16 %v344
      %v2250 = vunpack.c.h.b16 %v344
      %v2251 = vunpack.c.l.b16 %v345
      %v2252 = vunpack.c.h.b16 %v345
      %v2253 = vunpack.c.l.b16 %v346
      %v2254 = vunpack.c.h.b16 %v346
      %v2255 = vunpack.c.l.b16 %v347
      %v2256 = vunpack.c.h.b16 %v347
      %v2257 = vunpack.c.l.b16 %v348
      %v2258 = vunpack.c.h.b16 %v348
      %v2259 = vunpack.c.l.b16 %v349
      %v2260 = vunpack.c.h.b16 %v349
      %v2261 = vunpack.c.l.b16 %v350
      %v2262 = vunpack.c.h.b16 %v350
      %v2263 = vunpack.c.l.b16 %v351
      %v2264 = vunpack.c.h.b16 %v351
      %v2265 = vunpack.c.l.b16 %v352
      %v2266 = vunpack.c.h.b16 %v352
      %v2267 = vunpack.c.l.b16 %v353
      %v2268 = vunpack.c.h.b16 %v353
      %v2269 = vunpack.c.l.b16 %v354
      %v2270 = vunpack.c.h.b16 %v354
      %v2271 = vunpack.c.l.b16 %v355
      %v2272 = vunpack.c.h.b16 %v355
      %v2273 = vunpack.c.l.b16 %v356
      %v2274 = vunpack.c.h.b16 %v356
      %v2275 = vunpack.c.l.b16 %v357
      %v2276 = vunpack.c.h.b16 %v357
      %v2277 = vunpack.c.l.b16 %v358
      %v2278 = vunpack.c.h.b16 %v358
      %v2279 = vunpack.c.l.b16 %v359
      %v2280 = vunpack.c.h.b16 %v359
      %v2281 = vunpack.c.l.b16 %v360
      %v2282 = vunpack.c.h.b16 %v360
      %v2283 = vunpack.c.l.b16 %v361
      %v2284 = vunpack.c.h.b16 %v361
      %v2285 = vunpack.c.l.b16 %v362
      %v2286 = vunpack.c.h.b16 %v362
      %v2287 = vunpack.c.l.b16 %v363
      %v2288 = vunpack.c.h.b16 %v363
      %v2289 = vunpack.c.l.b16 %v364
      %v2290 = vunpack.c.h.b16 %v364
      %v2291 = vunpack.c.l.b16 %v365
      %v2292 = vunpack.c.h.b16 %v365
      %v2293 = vunpack.c.l.b16 %v366
      %v2294 = vunpack.c.h.b16 %v366
      %v2295 = vunpack.c.l.b16 %v367
      %v2296 = vunpack.c.h.b16 %v367
      %v2297 = vunpack.c.l.b16 %v368
      %v2298 = vunpack.c.h.b16 %v368
      %v2299 = vunpack.c.l.b16 %v369
      %v2300 = vunpack.c.h.b16 %v369
      %v2301 = vunpack.c.l.b16 %v370
      %v2302 = vunpack.c.h.b16 %v370
      %v2303 = vunpack.c.l.b16 %v371
      %v2304 = vunpack.c.h.b16 %v371
      %v2305 = vunpack.c.l.b16 %v372
      %v2306 = vunpack.c.h.b16 %v372
      %v2307 = vunpack.c.l.b16 %v373
      %v2308 = vunpack.c.h.b16 %v373
      %v2309 = vunpack.c.l.b16 %v374
      %v2310 = vunpack.c.h.b16 %v374
      %v2311 = vunpack.c.l.b16 %v375
      %v2312 = vunpack.c.h.b16 %v375
      %v2313 = vunpack.c.l.b16 %v376
      %v2314 = vunpack.c.h.b16 %v376
      %v2315 = vunpack.c.l.b16 %v377
      %v2316 = vunpack.c.h.b16 %v377
      %v2317 = vunpack.c.l.b16 %v378
      %v2318 = vunpack.c.h.b16 %v378
      %v2319 = vunpack.c.l.b16 %v379
      %v2320 = vunpack.c.h.b16 %v379
      %v2321 = vunpack.c.l.b16 %v380
      %v2322 = vunpack.c.h.b16 %v380
      %v2323 = vunpack.c.l.b16 %v381
      %v2324 = vunpack.c.h.b16 %v381
      %v2325 = vunpack.c.l.b16 %v382
      %v2326 = vunpack.c.h.b16 %v382
      %v2327 = vunpack.c.l.b16 %v383
      %v2328 = vunpack.c.h.b16 %v383
      %v2329 = vunpack.c.l.b16 %v384
      %v2330 = vunpack.c.h.b16 %v384
      %v2331 = vunpack.c.l.b16 %v385
      %v2332 = vunpack.c.h.b16 %v385
      %v2333 = vunpack.c.l.b16 %v386
      %v2334 = vunpack.c.h.b16 %v386
      %v2335 = vunpack.c.l.b16 %v387
      %v2336 = vunpack.c.h.b16 %v387
      %v2337 = vunpack.c.l.b16 %v388
      %v2338 = vunpack.c.h.b16 %v388
      %v2339 = vunpack.c.l.b16 %v389
      %v2340 = vunpack.c.h.b16 %v389
      %v2341 = vunpack.c.l.b16 %v390
      %v2342 = vunpack.c.h.b16 %v390
      %v2343 = vunpack.c.l.b16 %v391
      %v2344 = vunpack.c.h.b16 %v391
      %v2345 = vunpack.c.l.b16 %v392
      %v2346 = vunpack.c.h.b16 %v392
      %v2347 = vunpack.c.l.b16 %v393
      %v2348 = vunpack.c.h.b16 %v393
      %v2349 = vunpack.c.l.b16 %v394
      %v2350 = vunpack.c.h.b16 %v394
      %v2351 = vunpack.c.l.b16 %v395
      %v2352 = vunpack.c.h.b16 %v395
      %v2353 = vunpack.c.l.b16 %v396
      %v2354 = vunpack.c.h.b16 %v396
      %v2355 = vunpack.c.l.b16 %v397
      %v2356 = vunpack.c.h.b16 %v397
      %v2357 = vunpack.c.l.b16 %v398
      %v2358 = vunpack.c.h.b16 %v398
      %v2359 = vunpack.c.l.b16 %v399
      %v2360 = vunpack.c.h.b16 %v399
      %v2361 = vunpack.c.l.b16 %v400
      %v2362 = vunpack.c.h.b16 %v400
      %v2363 = vunpack.c.l.b16 %v401
      %v2364 = vunpack.c.h.b16 %v401
      %v2365 = vunpack.c.l.b16 %v402
      %v2366 = vunpack.c.h.b16 %v402
      %v2367 = vunpack.c.l.b16 %v403
      %v2368 = vunpack.c.h.b16 %v403
      %v2369 = vunpack.c.l.b16 %v404
      %v2370 = vunpack.c.h.b16 %v404
      %v2371 = vunpack.c.l.b16 %v405
      %v2372 = vunpack.c.h.b16 %v405
      %v2373 = vunpack.c.l.b16 %v406
      %v2374 = vunpack.c.h.b16 %v406
      %v2375 = vunpack.c.l.b16 %v407
      %v2376 = vunpack.c.h.b16 %v407
      %v2377 = vunpack.c.l.b16 %v408
      %v2378 = vunpack.c.h.b16 %v408
      %v2379 = vunpack.c.l.b16 %v409
      %v2380 = vunpack.c.h.b16 %v409
      %v2381 = vunpack.c.l.b16 %v410
      %v2382 = vunpack.c.h.b16 %v410
      %v2383 = vunpack.c.l.b16 %v411
      %v2384 = vunpack.c.h.b16 %v411
      %v2385 = vunpack.c.l.b16 %v412
      %v2386 = vunpack.c.h.b16 %v412
      %v2387 = vunpack.c.l.b16 %v413
      %v2388 = vunpack.c.h.b16 %v413
      %v2389 = vunpack.c.l.b16 %v414
      %v2390 = vunpack.c.h.b16 %v414
      %v2391 = vunpack.c.l.b16 %v415
      %v2392 = vunpack.c.h.b16 %v415
      %v2393 = vunpack.c.l.b16 %v416
      %v2394 = vunpack.c.h.b16 %v416
      %v2395 = vunpack.c.l.b16 %v417
      %v2396 = vunpack.c.h.b16 %v417
      %v2397 = vunpack.c.l.b16 %v418
      %v2398 = vunpack.c.h.b16 %v418
      %v2399 = vunpack.c.l.b16 %v419
      %v2400 = vunpack.c.h.b16 %v419
      %v2401 = vunpack.c.l.b16 %v420
      %v2402 = vunpack.c.h.b16 %v420
      %v2403 = vunpack.c.l.b16 %v421
      %v2404 = vunpack.c.h.b16 %v421
      %v2405 = vunpack.c.l.b16 %v422
      %v2406 = vunpack.c.h.b16 %v422
      %v2407 = vunpack.c.l.b16 %v423
      %v2408 = vunpack.c.h.b16 %v423
      %v2409 = vunpack.c.l.b16 %v424
      %v2410 = vunpack.c.h.b16 %v424
      %v2411 = vunpack.c.l.b16 %v425
      %v2412 = vunpack.c.h.b16 %v425
      %v2413 = vunpack.c.l.b16 %v426
      %v2414 = vunpack.c.h.b16 %v426
      %v2415 = vunpack.c.l.b16 %v427
      %v2416 = vunpack.c.h.b16 %v427
      %v2417 = vunpack.c.l.b16 %v428
      %v2418 = vunpack.c.h.b16 %v428
      %v2419 = vunpack.c.l.b16 %v429
      %v2420 = vunpack.c.h.b16 %v429
      %v2421 = vunpack.c.l.b16 %v430
      %v2422 = vunpack.c.h.b16 %v430
      %v2423 = vunpack.c.l.b16 %v431
      %v2424 = vunpack.c.h.b16 %v431
      %v2425 = vunpack.c.l.b16 %v432
      %v2426 = vunpack.c.h.b16 %v432
      %v2427 = vunpack.c.l.b16 %v433
      %v2428 = vunpack.c.h.b16 %v433
      %v2429 = vunpack.c.l.b16 %v434
      %v2430 = vunpack.c.h.b16 %v434
      %v2431 = vunpack.c.l.b16 %v435
      %v2432 = vunpack.c.h.b16 %v435
      %v2433 = vunpack.c.l.b16 %v436
      %v2434 = vunpack.c.h.b16 %v436
      %v2435 = vunpack.c.l.b16 %v437
      %v2436 = vunpack.c.h.b16 %v437
      %v2437 = vunpack.c.l.b16 %v438
      %v2438 = vunpack.c.h.b16 %v438
      %v2439 = vunpack.c.l.b16 %v439
      %v2440 = vunpack.c.h.b16 %v439
      %v2441 = vunpack.c.l.b16 %v440
      %v2442 = vunpack.c.h.b16 %v440
      %v2443 = vunpack.c.l.b16 %v441
      %v2444 = vunpack.c.h.b16 %v441
      %v2445 = vunpack.c.l.b16 %v442
      %v2446 = vunpack.c.h.b16 %v442
      %v2447 = vunpack.c.l.b16 %v443
      %v2448 = vunpack.c.h.b16 %v443
      %v2449 = vunpack.c.l.b16 %v444
      %v2450 = vunpack.c.h.b16 %v444
      %v2451 = vunpack.c.l.b16 %v445
      %v2452 = vunpack.c.h.b16 %v445
      %v2453 = vunpack.c.l.b16 %v446
      %v2454 = vunpack.c.h.b16 %v446
      %v2455 = vunpack.c.l.b16 %v447
      %v2456 = vunpack.c.h.b16 %v447
      %v2457 = vunpack.c.l.b16 %v448
      %v2458 = vunpack.c.h.b16 %v448
      %v2459 = vunpack.c.l.b16 %v449
      %v2460 = vunpack.c.h.b16 %v449
      %v2461 = vunpack.c.l.b16 %v450
      %v2462 = vunpack.c.h.b16 %v450
      %v2463 = vunpack.c.l.b16 %v451
      %v2464 = vunpack.c.h.b16 %v451
      %v2465 = vunpack.c.l.b16 %v452
      %v2466 = vunpack.c.h.b16 %v452
      %v2467 = vunpack.c.l.b16 %v453
      %v2468 = vunpack.c.h.b16 %v453
      %v2469 = vunpack.c.l.b16 %v454
      %v2470 = vunpack.c.h.b16 %v454
      %v2471 = vunpack.c.l.b16 %v455
      %v2472 = vunpack.c.h.b16 %v455
      %v2473 = vunpack.c.l.b16 %v456
      %v2474 = vunpack.c.h.b16 %v456
      %v2475 = vunpack.c.l.b16 %v457
      %v2476 = vunpack.c.h.b16 %v457
      %v2477 = vunpack.c.l.b16 %v458
      %v2478 = vunpack.c.h.b16 %v458
      %v2479 = vunpack.c.l.b16 %v459
      %v2480 = vunpack.c.h.b16 %v459
      %v2481 = vunpack.c.l.b16 %v460
      %v2482 = vunpack.c.h.b16 %v460
      %v2483 = vunpack.c.l.b16 %v461
      %v2484 = vunpack.c.h.b16 %v461
      %v2485 = vunpack.c.l.b16 %v462
      %v2486 = vunpack.c.h.b16 %v462
      %v2487 = vunpack.c.l.b16 %v463
      %v2488 = vunpack.c.h.b16 %v463
      %v2489 = vunpack.c.l.b16 %v464
      %v2490 = vunpack.c.h.b16 %v464
      %v2491 = vunpack.c.l.b16 %v465
      %v2492 = vunpack.c.h.b16 %v465
      %v2493 = vunpack.c.l.b16 %v466
      %v2494 = vunpack.c.h.b16 %v466
      %v2495 = vunpack.c.l.b16 %v467
      %v2496 = vunpack.c.h.b16 %v467
      %v2497 = vunpack.c.l.b16 %v468
      %v2498 = vunpack.c.h.b16 %v468
      %v2499 = vunpack.c.l.b16 %v469
      %v2500 = vunpack.c.h.b16 %v469
      %v2501 = vunpack.c.l.b16 %v470
      %v2502 = vunpack.c.h.b16 %v470
      %v2503 = vunpack.c.l.b16 %v471
      %v2504 = vunpack.c.h.b16 %v471
      %v2505 = vunpack.c.l.b16 %v472
      %v2506 = vunpack.c.h.b16 %v472
      %v2507 = vunpack.c.l.b16 %v473
      %v2508 = vunpack.c.h.b16 %v473
      %v2509 = vunpack.c.l.b16 %v474
      %v2510 = vunpack.c.h.b16 %v474
      %v2511 = vunpack.c.l.b16 %v475
      %v2512 = vunpack.c.h.b16 %v475
      %v2513 = vunpack.c.l.b16 %v476
      %v2514 = vunpack.c.h.b16 %v476
      %v2515 = vunpack.c.l.b16 %v477
      %v2516 = vunpack.c.h.b16 %v477
      %v2517 = vunpack.c.l.b16 %v478
      %v2518 = vunpack.c.h.b16 %v478
      %v2519 = vunpack.c.l.b16 %v479
      %v2520 = vunpack.c.h.b16 %v479
      %v2521 = vunpack.c.l.b16 %v480
      %v2522 = vunpack.c.h.b16 %v480
      %v2523 = vunpack.c.l.b16 %v481
      %v2524 = vunpack.c.h.b16 %v481
      %v2525 = vunpack.c.l.b16 %v482
      %v2526 = vunpack.c.h.b16 %v482
      %v2527 = vunpack.c.l.b16 %v483
      %v2528 = vunpack.c.h.b16 %v483
      %v2529 = vunpack.c.l.b16 %v484
      %v2530 = vunpack.c.h.b16 %v484
      %v2531 = vunpack.c.l.b16 %v485
      %v2532 = vunpack.c.h.b16 %v485
      %v2533 = vunpack.c.l.b16 %v486
      %v2534 = vunpack.c.h.b16 %v486
      %v2535 = vunpack.c.l.b16 %v487
      %v2536 = vunpack.c.h.b16 %v487
      %v2537 = vunpack.c.l.b16 %v488
      %v2538 = vunpack.c.h.b16 %v488
      %v2539 = vunpack.c.l.b16 %v489
      %v2540 = vunpack.c.h.b16 %v489
      %v2541 = vunpack.c.l.b16 %v490
      %v2542 = vunpack.c.h.b16 %v490
      %v2543 = vunpack.c.l.b16 %v491
      %v2544 = vunpack.c.h.b16 %v491
      %v2545 = vunpack.c.l.b16 %v492
      %v2546 = vunpack.c.h.b16 %v492
      %v2547 = vpack.c.b16 %v2167, %v2163
      %v2548 = vpack.c.b16 %v2168, %v2164
      %v2549 = vpack.c.b16 %v2169, %v2165
      %v2550 = vpack.c.b16 %v2170, %v2166
      %v2551 = vpack.c.b16 %v2175, %v2171
      %v2552 = vpack.c.b16 %v2176, %v2172
      %v2553 = vpack.c.b16 %v2177, %v2173
      %v2554 = vpack.c.b16 %v2178, %v2174
      %v2555 = vpack.c.b16 %v2183, %v2179
      %v2556 = vpack.c.b16 %v2184, %v2180
      %v2557 = vpack.c.b16 %v2185, %v2181
      %v2558 = vpack.c.b16 %v2186, %v2182
      %v2559 = vpack.c.b16 %v2191, %v2187
      %v2560 = vpack.c.b16 %v2192, %v2188
      %v2561 = vpack.c.b16 %v2193, %v2189
      %v2562 = vpack.c.b16 %v2194, %v2190
      %v2563 = vpack.c.b16 %v2199, %v2195
      %v2564 = vpack.c.b16 %v2200, %v2196
      %v2565 = vpack.c.b16 %v2201, %v2197
      %v2566 = vpack.c.b16 %v2202, %v2198
      %v2567 = vpack.c.b16 %v2207, %v2203
      %v2568 = vpack.c.b16 %v2208, %v2204
      %v2569 = vpack.c.b16 %v2209, %v2205
      %v2570 = vpack.c.b16 %v2210, %v2206
      %v2571 = vpack.c.b16 %v2215, %v2211
      %v2572 = vpack.c.b16 %v2216, %v2212
      %v2573 = vpack.c.b16 %v2217, %v2213
      %v2574 = vpack.c.b16 %v2218, %v2214
      %v2575 = vpack.c.b16 %v2223, %v2219
      %v2576 = vpack.c.b16 %v2224, %v2220
      %v2577 = vpack.c.b16 %v2225, %v2221
      %v2578 = vpack.c.b16 %v2226, %v2222
      %v2579 = vpack.c.b16 %v2231, %v2227
      %v2580 = vpack.c.b16 %v2232, %v2228
      %v2581 = vpack.c.b16 %v2233, %v2229
      %v2582 = vpack.c.b16 %v2234, %v2230
      %v2583 = vpack.c.b16 %v2239, %v2235
      %v2584 = vpack.c.b16 %v2240, %v2236
      %v2585 = vpack.c.b16 %v2241, %v2237
      %v2586 = vpack.c.b16 %v2242, %v2238
      %v2587 = vpack.c.b16 %v2247, %v2243
      %v2588 = vpack.c.b16 %v2248, %v2244
      %v2589 = vpack.c.b16 %v2249, %v2245
      %v2590 = vpack.c.b16 %v2250, %v2246
      %v2591 = vpack.c.b16 %v2255, %v2251
      %v2592 = vpack.c.b16 %v2256, %v2252
      %v2593 = vpack.c.b16 %v2257, %v2253
      %v2594 = vpack.c.b16 %v2258, %v2254
      %v2595 = vpack.c.b16 %v2263, %v2259
      %v2596 = vpack.c.b16 %v2264, %v2260
      %v2597 = vpack.c.b16 %v2265, %v2261
      %v2598 = vpack.c.b16 %v2266, %v2262
      %v2599 = vpack.c.b16 %v2271, %v2267
      %v2600 = vpack.c.b16 %v2272, %v2268
      %v2601 = vpack.c.b16 %v2273, %v2269
      %v2602 = vpack.c.b16 %v2274, %v2270
      %v2603 = vpack.c.b16 %v2279, %v2275
      %v2604 = vpack.c.b16 %v2280, %v2276
      %v2605 = vpack.c.b16 %v2281, %v2277
      %v2606 = vpack.c.b16 %v2282, %v2278
      %v2607 = vpack.c.b16 %v2287, %v2283
      %v2608 = vpack.c.b16 %v2288, %v2284
      %v2609 = vpack.c.b16 %v2289, %v2285
      %v2610 = vpack.c.b16 %v2290, %v2286
      %v2611 = vpack.c.b16 %v2295, %v2291
      %v2612 = vpack.c.b16 %v2296, %v2292
      %v2613 = vpack.c.b16 %v2297, %v2293
      %v2614 = vpack.c.b16 %v2298, %v2294
      %v2615 = vpack.c.b16 %v2303, %v2299
      %v2616 = vpack.c.b16 %v2304, %v2300
      %v2617 = vpack.c.b16 %v2305, %v2301
      %v2618 = vpack.c.b16 %v2306, %v2302
      %v2619 = vpack.c.b16 %v2311, %v2307
      %v2620 = vpack.c.b16 %v2312, %v2308
      %v2621 = vpack.c.b16 %v2313, %v2309
      %v2622 = vpack.c.b16 %v2314, %v2310
      %v2623 = vpack.c.b16 %v2319, %v2315
      %v2624 = vpack.c.b16 %v2320, %v2316
      %v2625 = vpack.c.b16 %v2321, %v2317
      %v2626 = vpack.c.b16 %v2322, %v2318
      %v2627 = vpack.c.b16 %v2327, %v2323
      %v2628 = vpack.c.b16 %v2328, %v2324
      %v2629 = vpack.c.b16 %v2329, %v2325
      %v2630 = vpack.c.b16 %v2330, %v2326
      %v2631 = vpack.c.b16 %v2335, %v2331
      %v2632 = vpack.c.b16 %v2336, %v2332
      %v2633 = vpack.c.b16 %v2337, %v2333
      %v2634 = vpack.c.b16 %v2338, %v2334
      %v2635 = vpack.c.b16 %v2343, %v2339
      %v2636 = vpack.c.b16 %v2344, %v2340
      %v2637 = vpack.c.b16 %v2345, %v2341
      %v2638 = vpack.c.b16 %v2346, %v2342
      %v2639 = vpack.c.b16 %v2351, %v2347
      %v2640 = vpack.c.b16 %v2352, %v2348
      %v2641 = vpack.c.b16 %v2353, %v2349
      %v2642 = vpack.c.b16 %v2354, %v2350
      %v2643 = vpack.c.b16 %v2359, %v2355
      %v2644 = vpack.c.b16 %v2360, %v2356
      %v2645 = vpack.c.b16 %v2361, %v2357
      %v2646 = vpack.c.b16 %v2362, %v2358
      %v2647 = vpack.c.b16 %v2367, %v2363
      %v2648 = vpack.c.b16 %v2368, %v2364
      %v2649 = vpack.c.b16 %v2369, %v2365
      %v2650 = vpack.c.b16 %v2370, %v2366
      %v2651 = vpack.c.b16 %v2375, %v2371
      %v2652 = vpack.c.b16 %v2376, %v2372
      %v2653 = vpack.c.b16 %v2377, %v2373
      %v2654 = vpack.c.b16 %v2378, %v2374
      %v2655 = vpack.c.b16 %v2383, %v2379
      %v2656 = vpack.c.b16 %v2384, %v2380
      %v2657 = vpack.c.b16 %v2385, %v2381
      %v2658 = vpack.c.b16 %v2386, %v2382
      %v2659 = vpack.c.b16 %v2391, %v2387
      %v2660 = vpack.c.b16 %v2392, %v2388
      %v2661 = vpack.c.b16 %v2393, %v2389
      %v2662 = vpack.c.b16 %v2394, %v2390
      %v2663 = vpack.c.b16 %v2399, %v2395
      %v2664 = vpack.c.b16 %v2400, %v2396
      %v2665 = vpack.c.b16 %v2401, %v2397
      %v2666 = vpack.c.b16 %v2402, %v2398
      %v2667 = vpack.c.b16 %v2407, %v2403
      %v2668 = vpack.c.b16 %v2408, %v2404
      %v2669 = vpack.c.b16 %v2409, %v2405
      %v2670 = vpack.c.b16 %v2410, %v2406
      %v2671 = vpack.c.b16 %v2415, %v2411
      %v2672 = vpack.c.b16 %v2416, %v2412
      %v2673 = vpack.c.b16 %v2417, %v2413
      %v2674 = vpack.c.b16 %v2418, %v2414
      %v2675 = vpack.c.b16 %v2423, %v2419
      %v2676 = vpack.c.b16 %v2424, %v2420
      %v2677 = vpack.c.b16 %v2425, %v2421
      %v2678 = vpack.c.b16 %v2426, %v2422
      %v2679 = vpack.c.b16 %v2431, %v2427
      %v2680 = vpack.c.b16 %v2432, %v2428
      %v2681 = vpack.c.b16 %v2433, %v2429
      %v2682 = vpack.c.b16 %v2434, %v2430
      %v2683 = vpack.c.b16 %v2439, %v2435
      %v2684 = vpack.c.b16 %v2440, %v2436
      %v2685 = vpack.c.b16 %v2441, %v2437
      %v2686 = vpack.c.b16 %v2442, %v2438
      %v2687 = vpack.c.b16 %v2447, %v2443
      %v2688 = vpack.c.b16 %v2448, %v2444
      %v2689 = vpack.c.b16 %v2449, %v2445
      %v2690 = vpack.c.b16 %v2450, %v2446
      %v2691 = vpack.c.b16 %v2455, %v2451
      %v2692 = vpack.c.b16 %v2456, %v2452
      %v2693 = vpack.c.b16 %v2457, %v2453
      %v2694 = vpack.c.b16 %v2458, %v2454
      %v2695 = vpack.c.b16 %v2463, %v2459
      %v2696 = vpack.c.b16 %v2464, %v2460
      %v2697 = vpack.c.b16 %v2465, %v2461
      %v2698 = vpack.c.b16 %v2466, %v2462
      %v2699 = vpack.c.b16 %v2471, %v2467
      %v2700 = vpack.c.b16 %v2472, %v2468
      %v2701 = vpack.c.b16 %v2473, %v2469
      %v2702 = vpack.c.b16 %v2474, %v2470
      %v2703 = vpack.c.b16 %v2479, %v2475
      %v2704 = vpack.c.b16 %v2480, %v2476
      %v2705 = vpack.c.b16 %v2481, %v2477
      %v2706 = vpack.c.b16 %v2482, %v2478
      %v2707 = vpack.c.b16 %v2487, %v2483
      %v2708 = vpack.c.b16 %v2488, %v2484
      %v2709 = vpack.c.b16 %v2489, %v2485
      %v2710 = vpack.c.b16 %v2490, %v2486
      %v2711 = vpack.c.b16 %v2495, %v2491
      %v2712 = vpack.c.b16 %v2496, %v2492
      %v2713 = vpack.c.b16 %v2497, %v2493
      %v2714 = vpack.c.b16 %v2498, %v2494
      %v2715 = vpack.c.b16 %v2503, %v2499
      %v2716 = vpack.c.b16 %v2504, %v2500
      %v2717 = vpack.c.b16 %v2505, %v2501
      %v2718 = vpack.c.b16 %v2506, %v2502
      %v2719 = vpack.c.b16 %v2511, %v2507
      %v2720 = vpack.c.b16 %v2512, %v2508
      %v2721 = vpack.c.b16 %v2513, %v2509
      %v2722 = vpack.c.b16 %v2514, %v2510
      %v2723 = vpack.c.b16 %v2519, %v2515
      %v2724 = vpack.c.b16 %v2520, %v2516
      %v2725 = vpack.c.b16 %v2521, %v2517
      %v2726 = vpack.c.b16 %v2522, %v2518
      %v2727 = vpack.c.b16 %v2527, %v2523
      %v2728 = vpack.c.b16 %v2528, %v2524
      %v2729 = vpack.c.b16 %v2529, %v2525
      %v2730 = vpack.c.b16 %v2530, %v2526
      %v2731 = vpack.c.b16 %v2535, %v2531
      %v2732 = vpack.c.b16 %v2536, %v2532
      %v2733 = vpack.c.b16 %v2537, %v2533
      %v2734 = vpack.c.b16 %v2538, %v2534
      %v2735 = vpack.c.b16 %v2543, %v2539
      %v2736 = vpack.c.b16 %v2544, %v2540
      %v2737 = vpack.c.b16 %v2545, %v2541
      %v2738 = vpack.c.b16 %v2546, %v2542
      %2931 = vmatpush.bf16.msra.mxu0 %v2575
      %2932 = vmatpush.bf16.msra.mxu0 %v2571
      %2933 = vmatpush.bf16.msra.mxu0 %v2567
      %2934 = vmatpush.bf16.msra.mxu0 %v2563
      %2935 = vmatpush.bf16.msra.mxu0 %v2559
      %2936 = vmatpush.bf16.msra.mxu0 %v2555
      %2937 = vmatpush.bf16.msra.mxu0 %v2551
      %2938 = vmatpush.bf16.msra.mxu0 %v2547
      %2939 = vmatmul.bf16.gmra.mxu0 %v1959
      %v2940 = vpop.f32.mrf.mxu0
      %v2941 = vadd.f32 %v1720, %v2940
      %v2942 = vpop.f32.mrf.mxu0
      %2943 = vdwg.mxu0
      %2944 = vmatpush.bf16.msra.mxu0 %v2607
      %2945 = vmatpush.bf16.msra.mxu0 %v2603
      %2946 = vmatpush.bf16.msra.mxu0 %v2599
      %2947 = vmatpush.bf16.msra.mxu0 %v2595
      %2948 = vmatpush.bf16.msra.mxu0 %v2591
      %2949 = vmatpush.bf16.msra.mxu0 %v2587
      %2950 = vmatpush.bf16.msra.mxu0 %v2583
      %2951 = vmatpush.bf16.msra.mxu0 %v2579
      %2952 = vmatmul.bf16.gmra.mxu0 %v1960
      %v2953 = vpop.f32.mrf.mxu0
      %v2954 = vadd.f32 %v2941, %v2953
      %v2955 = vpop.f32.mrf.mxu0
      %2956 = vdwg.mxu0
      %2957 = vmatpush.bf16.msra.mxu0 %v2639
      %2958 = vmatpush.bf16.msra.mxu0 %v2635
      %2959 = vmatpush.bf16.msra.mxu0 %v2631
      %2960 = vmatpush.bf16.msra.mxu0 %v2627
      %2961 = vmatpush.bf16.msra.mxu0 %v2623
      %2962 = vmatpush.bf16.msra.mxu0 %v2619
      %2963 = vmatpush.bf16.msra.mxu0 %v2615
      %2964 = vmatpush.bf16.msra.mxu0 %v2611
      %2965 = vmatmul.bf16.gmra.mxu0 %v1961
      %v2966 = vpop.f32.mrf.mxu0
      %v2967 = vadd.f32 %v2954, %v2966
      %v2968 = vpop.f32.mrf.mxu0
      %2969 = vdwg.mxu0
      %2970 = vmatpush.bf16.msra.mxu0 %v2671
      %2971 = vmatpush.bf16.msra.mxu0 %v2667
      %2972 = vmatpush.bf16.msra.mxu0 %v2663
      %2973 = vmatpush.bf16.msra.mxu0 %v2659
      %2974 = vmatpush.bf16.msra.mxu0 %v2655
      %2975 = vmatpush.bf16.msra.mxu0 %v2651
      %2976 = vmatpush.bf16.msra.mxu0 %v2647
      %2977 = vmatpush.bf16.msra.mxu0 %v2643
      %2978 = vmatmul.bf16.gmra.mxu0 %v1962
      %v2979 = vpop.f32.mrf.mxu0
      %v2980 = vadd.f32 %v2967, %v2979
      %v2981 = vpop.f32.mrf.mxu0
      %2982 = vdwg.mxu0
      %2983 = vmatpush.bf16.msra.mxu0 %v2703
      %2984 = vmatpush.bf16.msra.mxu0 %v2699
      %2985 = vmatpush.bf16.msra.mxu0 %v2695
      %2986 = vmatpush.bf16.msra.mxu0 %v2691
      %2987 = vmatpush.bf16.msra.mxu0 %v2687
      %2988 = vmatpush.bf16.msra.mxu0 %v2683
      %2989 = vmatpush.bf16.msra.mxu0 %v2679
      %2990 = vmatpush.bf16.msra.mxu0 %v2675
      %2991 = vmatmul.bf16.gmra.mxu0 %v1963
      %v2992 = vpop.f32.mrf.mxu0
      %v2993 = vadd.f32 %v2980, %v2992
      %v2994 = vpop.f32.mrf.mxu0
      %2995 = vdwg.mxu0
      %2996 = vmatpush.bf16.msra.mxu0 %v2735
      %2997 = vmatpush.bf16.msra.mxu0 %v2731
      %2998 = vmatpush.bf16.msra.mxu0 %v2727
      %2999 = vmatpush.bf16.msra.mxu0 %v2723
      %3000 = vmatpush.bf16.msra.mxu0 %v2719
      %3001 = vmatpush.bf16.msra.mxu0 %v2715
      %3002 = vmatpush.bf16.msra.mxu0 %v2711
      %3003 = vmatpush.bf16.msra.mxu0 %v2707
      %3004 = vmatmul.bf16.gmra.mxu0 %v1964
      %v3005 = vpop.f32.mrf.mxu0
      %v3006 = vadd.f32 %v2993, %v3005
      %v3007 = vpop.f32.mrf.mxu0
      %3008 = vdwg.mxu0
      %3009 = vmatpush.bf16.msra.mxu0 %v2576
      %3010 = vmatpush.bf16.msra.mxu0 %v2572
      %3011 = vmatpush.bf16.msra.mxu0 %v2568
      %3012 = vmatpush.bf16.msra.mxu0 %v2564
      %3013 = vmatpush.bf16.msra.mxu0 %v2560
      %3014 = vmatpush.bf16.msra.mxu0 %v2556
      %3015 = vmatpush.bf16.msra.mxu0 %v2552
      %3016 = vmatpush.bf16.msra.mxu0 %v2548
      %3017 = vmatmul.bf16.gmra.mxu0 %v1959
      %v3018 = vpop.f32.mrf.mxu0
      %v3019 = vadd.f32 %v1798, %v3018
      %v3020 = vpop.f32.mrf.mxu0
      %3021 = vdwg.mxu0
      %3022 = vmatpush.bf16.msra.mxu0 %v2608
      %3023 = vmatpush.bf16.msra.mxu0 %v2604
      %3024 = vmatpush.bf16.msra.mxu0 %v2600
      %3025 = vmatpush.bf16.msra.mxu0 %v2596
      %3026 = vmatpush.bf16.msra.mxu0 %v2592
      %3027 = vmatpush.bf16.msra.mxu0 %v2588
      %3028 = vmatpush.bf16.msra.mxu0 %v2584
      %3029 = vmatpush.bf16.msra.mxu0 %v2580
      %3030 = vmatmul.bf16.gmra.mxu0 %v1960
      %v3031 = vpop.f32.mrf.mxu0
      %v3032 = vadd.f32 %v3019, %v3031
      %v3033 = vpop.f32.mrf.mxu0
      %3034 = vdwg.mxu0
      %3035 = vmatpush.bf16.msra.mxu0 %v2640
      %3036 = vmatpush.bf16.msra.mxu0 %v2636
      %3037 = vmatpush.bf16.msra.mxu0 %v2632
      %3038 = vmatpush.bf16.msra.mxu0 %v2628
      %3039 = vmatpush.bf16.msra.mxu0 %v2624
      %3040 = vmatpush.bf16.msra.mxu0 %v2620
      %3041 = vmatpush.bf16.msra.mxu0 %v2616
      %3042 = vmatpush.bf16.msra.mxu0 %v2612
      %3043 = vmatmul.bf16.gmra.mxu0 %v1961
      %v3044 = vpop.f32.mrf.mxu0
      %v3045 = vadd.f32 %v3032, %v3044
      %v3046 = vpop.f32.mrf.mxu0
      %3047 = vdwg.mxu0
      %3048 = vmatpush.bf16.msra.mxu0 %v2672
      %3049 = vmatpush.bf16.msra.mxu0 %v2668
      %3050 = vmatpush.bf16.msra.mxu0 %v2664
      %3051 = vmatpush.bf16.msra.mxu0 %v2660
      %3052 = vmatpush.bf16.msra.mxu0 %v2656
      %3053 = vmatpush.bf16.msra.mxu0 %v2652
      %3054 = vmatpush.bf16.msra.mxu0 %v2648
      %3055 = vmatpush.bf16.msra.mxu0 %v2644
      %3056 = vmatmul.bf16.gmra.mxu0 %v1962
      %v3057 = vpop.f32.mrf.mxu0
      %v3058 = vadd.f32 %v3045, %v3057
      %v3059 = vpop.f32.mrf.mxu0
      %3060 = vdwg.mxu0
      %3061 = vmatpush.bf16.msra.mxu0 %v2704
      %3062 = vmatpush.bf16.msra.mxu0 %v2700
      %3063 = vmatpush.bf16.msra.mxu0 %v2696
      %3064 = vmatpush.bf16.msra.mxu0 %v2692
      %3065 = vmatpush.bf16.msra.mxu0 %v2688
      %3066 = vmatpush.bf16.msra.mxu0 %v2684
      %3067 = vmatpush.bf16.msra.mxu0 %v2680
      %3068 = vmatpush.bf16.msra.mxu0 %v2676
      %3069 = vmatmul.bf16.gmra.mxu0 %v1963
      %v3070 = vpop.f32.mrf.mxu0
      %v3071 = vadd.f32 %v3058, %v3070
      %v3072 = vpop.f32.mrf.mxu0
      %3073 = vdwg.mxu0
      %3074 = vmatpush.bf16.msra.mxu0 %v2736
      %3075 = vmatpush.bf16.msra.mxu0 %v2732
      %3076 = vmatpush.bf16.msra.mxu0 %v2728
      %3077 = vmatpush.bf16.msra.mxu0 %v2724
      %3078 = vmatpush.bf16.msra.mxu0 %v2720
      %3079 = vmatpush.bf16.msra.mxu0 %v2716
      %3080 = vmatpush.bf16.msra.mxu0 %v2712
      %3081 = vmatpush.bf16.msra.mxu0 %v2708
      %3082 = vmatmul.bf16.gmra.mxu0 %v1964
      %v3083 = vpop.f32.mrf.mxu0
      %v3084 = vadd.f32 %v3071, %v3083
      %v3085 = vpop.f32.mrf.mxu0
      %3086 = vdwg.mxu0
      %3087 = vmatpush.bf16.msra.mxu0 %v2577
      %3088 = vmatpush.bf16.msra.mxu0 %v2573
      %3089 = vmatpush.bf16.msra.mxu0 %v2569
      %3090 = vmatpush.bf16.msra.mxu0 %v2565
      %3091 = vmatpush.bf16.msra.mxu0 %v2561
      %3092 = vmatpush.bf16.msra.mxu0 %v2557
      %3093 = vmatpush.bf16.msra.mxu0 %v2553
      %3094 = vmatpush.bf16.msra.mxu0 %v2549
      %3095 = vmatmul.bf16.gmra.mxu0 %v1959
      %v3096 = vpop.f32.mrf.mxu0
      %v3097 = vadd.f32 %v1876, %v3096
      %v3098 = vpop.f32.mrf.mxu0
      %3099 = vdwg.mxu0
      %3100 = vmatpush.bf16.msra.mxu0 %v2609
      %3101 = vmatpush.bf16.msra.mxu0 %v2605
      %3102 = vmatpush.bf16.msra.mxu0 %v2601
      %3103 = vmatpush.bf16.msra.mxu0 %v2597
      %3104 = vmatpush.bf16.msra.mxu0 %v2593
      %3105 = vmatpush.bf16.msra.mxu0 %v2589
      %3106 = vmatpush.bf16.msra.mxu0 %v2585
      %3107 = vmatpush.bf16.msra.mxu0 %v2581
      %3108 = vmatmul.bf16.gmra.mxu0 %v1960
      %v3109 = vpop.f32.mrf.mxu0
      %v3110 = vadd.f32 %v3097, %v3109
      %v3111 = vpop.f32.mrf.mxu0
      %3112 = vdwg.mxu0
      %3113 = vmatpush.bf16.msra.mxu0 %v2641
      %3114 = vmatpush.bf16.msra.mxu0 %v2637
      %3115 = vmatpush.bf16.msra.mxu0 %v2633
      %3116 = vmatpush.bf16.msra.mxu0 %v2629
      %3117 = vmatpush.bf16.msra.mxu0 %v2625
      %3118 = vmatpush.bf16.msra.mxu0 %v2621
      %3119 = vmatpush.bf16.msra.mxu0 %v2617
      %3120 = vmatpush.bf16.msra.mxu0 %v2613
      %3121 = vmatmul.bf16.gmra.mxu0 %v1961
      %v3122 = vpop.f32.mrf.mxu0
      %v3123 = vadd.f32 %v3110, %v3122
      %v3124 = vpop.f32.mrf.mxu0
      %3125 = vdwg.mxu0
      %3126 = vmatpush.bf16.msra.mxu0 %v2673
      %3127 = vmatpush.bf16.msra.mxu0 %v2669
      %3128 = vmatpush.bf16.msra.mxu0 %v2665
      %3129 = vmatpush.bf16.msra.mxu0 %v2661
      %3130 = vmatpush.bf16.msra.mxu0 %v2657
      %3131 = vmatpush.bf16.msra.mxu0 %v2653
      %3132 = vmatpush.bf16.msra.mxu0 %v2649
      %3133 = vmatpush.bf16.msra.mxu0 %v2645
      %3134 = vmatmul.bf16.gmra.mxu0 %v1962
      %v3135 = vpop.f32.mrf.mxu0
      %v3136 = vadd.f32 %v3123, %v3135
      %v3137 = vpop.f32.mrf.mxu0
      %3138 = vdwg.mxu0
      %3139 = vmatpush.bf16.msra.mxu0 %v2705
      %3140 = vmatpush.bf16.msra.mxu0 %v2701
      %3141 = vmatpush.bf16.msra.mxu0 %v2697
      %3142 = vmatpush.bf16.msra.mxu0 %v2693
      %3143 = vmatpush.bf16.msra.mxu0 %v2689
      %3144 = vmatpush.bf16.msra.mxu0 %v2685
      %3145 = vmatpush.bf16.msra.mxu0 %v2681
      %3146 = vmatpush.bf16.msra.mxu0 %v2677
      %3147 = vmatmul.bf16.gmra.mxu0 %v1963
      %v3148 = vpop.f32.mrf.mxu0
      %v3149 = vadd.f32 %v3136, %v3148
      %v3150 = vpop.f32.mrf.mxu0
      %3151 = vdwg.mxu0
      %3152 = vmatpush.bf16.msra.mxu0 %v2737
      %3153 = vmatpush.bf16.msra.mxu0 %v2733
      %3154 = vmatpush.bf16.msra.mxu0 %v2729
      %3155 = vmatpush.bf16.msra.mxu0 %v2725
      %3156 = vmatpush.bf16.msra.mxu0 %v2721
      %3157 = vmatpush.bf16.msra.mxu0 %v2717
      %3158 = vmatpush.bf16.msra.mxu0 %v2713
      %3159 = vmatpush.bf16.msra.mxu0 %v2709
      %3160 = vmatmul.bf16.gmra.mxu0 %v1964
      %v3161 = vpop.f32.mrf.mxu0
      %v3162 = vadd.f32 %v3149, %v3161
      %v3163 = vpop.f32.mrf.mxu0
      %3164 = vdwg.mxu0
      %3165 = vmatpush.bf16.msra.mxu0 %v2578
      %3166 = vmatpush.bf16.msra.mxu0 %v2574
      %3167 = vmatpush.bf16.msra.mxu0 %v2570
      %3168 = vmatpush.bf16.msra.mxu0 %v2566
      %3169 = vmatpush.bf16.msra.mxu0 %v2562
      %3170 = vmatpush.bf16.msra.mxu0 %v2558
      %3171 = vmatpush.bf16.msra.mxu0 %v2554
      %3172 = vmatpush.bf16.msra.mxu0 %v2550
      %3173 = vmatmul.bf16.gmra.mxu0 %v1959
      %v3174 = vpop.f32.mrf.mxu0
      %v3175 = vadd.f32 %v1954, %v3174
      %v3176 = vpop.f32.mrf.mxu0
      %3177 = vdwg.mxu0
      %3178 = vmatpush.bf16.msra.mxu0 %v2610
      %3179 = vmatpush.bf16.msra.mxu0 %v2606
      %3180 = vmatpush.bf16.msra.mxu0 %v2602
      %3181 = vmatpush.bf16.msra.mxu0 %v2598
      %3182 = vmatpush.bf16.msra.mxu0 %v2594
      %3183 = vmatpush.bf16.msra.mxu0 %v2590
      %3184 = vmatpush.bf16.msra.mxu0 %v2586
      %3185 = vmatpush.bf16.msra.mxu0 %v2582
      %3186 = vmatmul.bf16.gmra.mxu0 %v1960
      %v3187 = vpop.f32.mrf.mxu0
      %v3188 = vadd.f32 %v3175, %v3187
      %v3189 = vpop.f32.mrf.mxu0
      %3190 = vdwg.mxu0
      %3191 = vmatpush.bf16.msra.mxu0 %v2642
      %3192 = vmatpush.bf16.msra.mxu0 %v2638
      %3193 = vmatpush.bf16.msra.mxu0 %v2634
      %3194 = vmatpush.bf16.msra.mxu0 %v2630
      %3195 = vmatpush.bf16.msra.mxu0 %v2626
      %3196 = vmatpush.bf16.msra.mxu0 %v2622
      %3197 = vmatpush.bf16.msra.mxu0 %v2618
      %3198 = vmatpush.bf16.msra.mxu0 %v2614
      %3199 = vmatmul.bf16.gmra.mxu0 %v1961
      %v3200 = vpop.f32.mrf.mxu0
      %v3201 = vadd.f32 %v3188, %v3200
      %v3202 = vpop.f32.mrf.mxu0
      %3203 = vdwg.mxu0
      %3204 = vmatpush.bf16.msra.mxu0 %v2674
      %3205 = vmatpush.bf16.msra.mxu0 %v2670
      %3206 = vmatpush.bf16.msra.mxu0 %v2666
      %3207 = vmatpush.bf16.msra.mxu0 %v2662
      %3208 = vmatpush.bf16.msra.mxu0 %v2658
      %3209 = vmatpush.bf16.msra.mxu0 %v2654
      %3210 = vmatpush.bf16.msra.mxu0 %v2650
      %3211 = vmatpush.bf16.msra.mxu0 %v2646
      %3212 = vmatmul.bf16.gmra.mxu0 %v1962
      %v3213 = vpop.f32.mrf.mxu0
      %v3214 = vadd.f32 %v3201, %v3213
      %v3215 = vpop.f32.mrf.mxu0
      %3216 = vdwg.mxu0
      %3217 = vmatpush.bf16.msra.mxu0 %v2706
      %3218 = vmatpush.bf16.msra.mxu0 %v2702
      %3219 = vmatpush.bf16.msra.mxu0 %v2698
      %3220 = vmatpush.bf16.msra.mxu0 %v2694
      %3221 = vmatpush.bf16.msra.mxu0 %v2690
      %3222 = vmatpush.bf16.msra.mxu0 %v2686
      %3223 = vmatpush.bf16.msra.mxu0 %v2682
      %3224 = vmatpush.bf16.msra.mxu0 %v2678
      %3225 = vmatmul.bf16.gmra.mxu0 %v1963
      %v3226 = vpop.f32.mrf.mxu0
      %v3227 = vadd.f32 %v3214, %v3226
      %v3228 = vpop.f32.mrf.mxu0
      %3229 = vdwg.mxu0
      %3230 = vmatpush.bf16.msra.mxu0 %v2738
      %3231 = vmatpush.bf16.msra.mxu0 %v2734
      %3232 = vmatpush.bf16.msra.mxu0 %v2730
      %3233 = vmatpush.bf16.msra.mxu0 %v2726
      %3234 = vmatpush.bf16.msra.mxu0 %v2722
      %3235 = vmatpush.bf16.msra.mxu0 %v2718
      %3236 = vmatpush.bf16.msra.mxu0 %v2714
      %3237 = vmatpush.bf16.msra.mxu0 %v2710
      %3238 = vmatmul.bf16.gmra.mxu0 %v1964
      %v3239 = vpop.f32.mrf.mxu0
      %v3240 = vadd.f32 %v3227, %v3239
      %v3241 = vpop.f32.mrf.mxu0
      %3242 = vdwg.mxu0
      %v3243 = vld [vmem:[#allocation11] sm:$0xf]
      %v3245 = vperm.slane %v3243, 0
      %v3246 = vperm.slane %v3243, 1
      %v3247 = vperm.slane %v3243, 2
      %v3248 = vperm.slane %v3243, 3
      %v3253 = vadd.f32 %v3006, %v3245
      %v3254 = vadd.f32 %v3084, %v3246
      %v3255 = vadd.f32 %v3162, %v3247
      %v3256 = vadd.f32 %v3240, %v3248
      %v3257 = vmax.f32 %v3253, 0.0
      %v3258 = vmax.f32 %v3254, 0.0
      %v3259 = vmax.f32 %v3255, 0.0
      %v3260 = vmax.f32 %v3256, 0.0
      %v3261 = vpack.c.bf16 %v3257, %v3257
      %v3262 = vpack.c.bf16 %v3258, %v3258
      %v3263 = vpack.c.bf16 %v3259, %v3259
      %v3264 = vpack.c.bf16 %v3260, %v3260
      %v3265 = vld [vmem:[#allocation12] sm:$0xf]
      %v3266 = vld [vmem:[#allocation12 + $0x4] sm:$0xf]
      %v3267 = vld [vmem:[#allocation12 + $0x8] sm:$0xf]
      %v3268 = vld [vmem:[#allocation12 + $0xc] sm:$0xf]
      %v3269 = vld [vmem:[#allocation12 + $0x10] sm:$0xf]
      %v3270 = vld [vmem:[#allocation12 + $0x14] sm:$0xf]
      %v3271 = vld [vmem:[#allocation12 + $0x18] sm:$0xf]
      %v3272 = vld [vmem:[#allocation12 + $0x1c] sm:$0xf]
      %v3273 = vld [vmem:[#allocation12 + $0x20] sm:$0xf]
      %v3274 = vld [vmem:[#allocation12 + $0x24] sm:$0xf]
      %v3275 = vld [vmem:[#allocation12 + $0x28] sm:$0xf]
      %v3276 = vld [vmem:[#allocation12 + $0x2c] sm:$0xf]
      %v3277 = vld [vmem:[#allocation12 + $0x30] sm:$0xf]
      %v3278 = vld [vmem:[#allocation12 + $0x34] sm:$0xf]
      %v3279 = vld [vmem:[#allocation12 + $0x38] sm:$0xf]
      %v3280 = vld [vmem:[#allocation12 + $0x3c] sm:$0xf]
      %v3281 = vld [vmem:[#allocation12 + $0x40] sm:$0xf]
      %v3282 = vld [vmem:[#allocation12 + $0x44] sm:$0xf]
      %v3283 = vld [vmem:[#allocation12 + $0x48] sm:$0xf]
      %v3284 = vld [vmem:[#allocation12 + $0x4c] sm:$0xf]
      %v3285 = vld [vmem:[#allocation12 + $0x50] sm:$0xf]
      %v3286 = vld [vmem:[#allocation12 + $0x54] sm:$0xf]
      %v3287 = vld [vmem:[#allocation12 + $0x58] sm:$0xf]
      %v3288 = vld [vmem:[#allocation12 + $0x5c] sm:$0xf]
      %v3289 = vld [vmem:[#allocation12 + $0x60] sm:$0xf]
      %v3290 = vld [vmem:[#allocation12 + $0x64] sm:$0xf]
      %v3291 = vld [vmem:[#allocation12 + $0x68] sm:$0xf]
      %v3292 = vld [vmem:[#allocation12 + $0x6c] sm:$0xf]
      %v3293 = vld [vmem:[#allocation12 + $0x70] sm:$0xf]
      %v3294 = vld [vmem:[#allocation12 + $0x74] sm:$0xf]
      %v3295 = vld [vmem:[#allocation12 + $0x78] sm:$0xf]
      %v3296 = vld [vmem:[#allocation12 + $0x7c] sm:$0xf]
      %v3297 = vld [vmem:[#allocation12 + $0x80] sm:$0xf]
      %v3298 = vld [vmem:[#allocation12 + $0x84] sm:$0xf]
      %v3299 = vld [vmem:[#allocation12 + $0x88] sm:$0xf]
      %v3300 = vld [vmem:[#allocation12 + $0x8c] sm:$0xf]
      %v3301 = vld [vmem:[#allocation12 + $0x90] sm:$0xf]
      %v3302 = vld [vmem:[#allocation12 + $0x94] sm:$0xf]
      %v3303 = vld [vmem:[#allocation12 + $0x98] sm:$0xf]
      %v3304 = vld [vmem:[#allocation12 + $0x9c] sm:$0xf]
      %v3305 = vld [vmem:[#allocation12 + $0xa0] sm:$0xf]
      %v3306 = vld [vmem:[#allocation12 + $0xa4] sm:$0xf]
      %v3307 = vld [vmem:[#allocation12 + $0xa8] sm:$0xf]
      %v3308 = vld [vmem:[#allocation12 + $0xac] sm:$0xf]
      %v3309 = vld [vmem:[#allocation12 + $0xb0] sm:$0xf]
      %v3310 = vld [vmem:[#allocation12 + $0xb4] sm:$0xf]
      %v3311 = vld [vmem:[#allocation12 + $0xb8] sm:$0xf]
      %v3312 = vld [vmem:[#allocation12 + $0xbc] sm:$0xf]
      %v3313 = vld [vmem:[#allocation12 + $0xc0] sm:$0xf]
      %v3314 = vld [vmem:[#allocation12 + $0xc4] sm:$0xf]
      %v3315 = vld [vmem:[#allocation12 + $0xc8] sm:$0xf]
      %v3316 = vld [vmem:[#allocation12 + $0xcc] sm:$0xf]
      %v3317 = vld [vmem:[#allocation12 + $0xd0] sm:$0xf]
      %v3318 = vld [vmem:[#allocation12 + $0xd4] sm:$0xf]
      %v3319 = vld [vmem:[#allocation12 + $0xd8] sm:$0xf]
      %v3320 = vld [vmem:[#allocation12 + $0xdc] sm:$0xf]
      %v3321 = vld [vmem:[#allocation12 + $0xe0] sm:$0xf]
      %v3322 = vld [vmem:[#allocation12 + $0xe4] sm:$0xf]
      %v3323 = vld [vmem:[#allocation12 + $0xe8] sm:$0xf]
      %v3324 = vld [vmem:[#allocation12 + $0xec] sm:$0xf]
      %v3325 = vld [vmem:[#allocation12 + $0xf0] sm:$0xf]
      %v3326 = vld [vmem:[#allocation12 + $0xf4] sm:$0xf]
      %v3327 = vld [vmem:[#allocation12 + $0xf8] sm:$0xf]
      %v3328 = vld [vmem:[#allocation12 + $0xfc] sm:$0xf]
      %v3329 = vld [vmem:[%s6] sm:$0x1]
      %v3331 = vperm.slane %v3329, 0
      %v3397 = vunpack.c.l.b16 %v3265
      %v3398 = vunpack.c.l.b16 %v3266
      %v3399 = vunpack.c.l.b16 %v3267
      %v3400 = vunpack.c.l.b16 %v3268
      %v3401 = vunpack.c.l.b16 %v3269
      %v3402 = vunpack.c.l.b16 %v3270
      %v3403 = vunpack.c.l.b16 %v3271
      %v3404 = vunpack.c.l.b16 %v3272
      %v3405 = vunpack.c.l.b16 %v3273
      %v3406 = vunpack.c.l.b16 %v3274
      %v3407 = vunpack.c.l.b16 %v3275
      %v3408 = vunpack.c.l.b16 %v3276
      %v3409 = vunpack.c.l.b16 %v3277
      %v3410 = vunpack.c.l.b16 %v3278
      %v3411 = vunpack.c.l.b16 %v3279
      %v3412 = vunpack.c.l.b16 %v3280
      %v3413 = vunpack.c.l.b16 %v3281
      %v3414 = vunpack.c.l.b16 %v3282
      %v3415 = vunpack.c.l.b16 %v3283
      %v3416 = vunpack.c.l.b16 %v3284
      %v3417 = vunpack.c.l.b16 %v3285
      %v3418 = vunpack.c.l.b16 %v3286
      %v3419 = vunpack.c.l.b16 %v3287
      %v3420 = vunpack.c.l.b16 %v3288
      %v3421 = vunpack.c.l.b16 %v3289
      %v3422 = vunpack.c.l.b16 %v3290
      %v3423 = vunpack.c.l.b16 %v3291
      %v3424 = vunpack.c.l.b16 %v3292
      %v3425 = vunpack.c.l.b16 %v3293
      %v3426 = vunpack.c.l.b16 %v3294
      %v3427 = vunpack.c.l.b16 %v3295
      %v3428 = vunpack.c.l.b16 %v3296
      %v3429 = vunpack.c.l.b16 %v3297
      %v3430 = vunpack.c.l.b16 %v3298
      %v3431 = vunpack.c.l.b16 %v3299
      %v3432 = vunpack.c.l.b16 %v3300
      %v3433 = vunpack.c.l.b16 %v3301
      %v3434 = vunpack.c.l.b16 %v3302
      %v3435 = vunpack.c.l.b16 %v3303
      %v3436 = vunpack.c.l.b16 %v3304
      %v3437 = vunpack.c.l.b16 %v3305
      %v3438 = vunpack.c.l.b16 %v3306
      %v3439 = vunpack.c.l.b16 %v3307
      %v3440 = vunpack.c.l.b16 %v3308
      %v3441 = vunpack.c.l.b16 %v3309
      %v3442 = vunpack.c.l.b16 %v3310
      %v3443 = vunpack.c.l.b16 %v3311
      %v3444 = vunpack.c.l.b16 %v3312
      %v3445 = vunpack.c.l.b16 %v3313
      %v3446 = vunpack.c.l.b16 %v3314
      %v3447 = vunpack.c.l.b16 %v3315
      %v3448 = vunpack.c.l.b16 %v3316
      %v3449 = vunpack.c.l.b16 %v3317
      %v3450 = vunpack.c.l.b16 %v3318
      %v3451 = vunpack.c.l.b16 %v3319
      %v3452 = vunpack.c.l.b16 %v3320
      %v3453 = vunpack.c.l.b16 %v3321
      %v3454 = vunpack.c.l.b16 %v3322
      %v3455 = vunpack.c.l.b16 %v3323
      %v3456 = vunpack.c.l.b16 %v3324
      %v3457 = vunpack.c.l.b16 %v3325
      %v3458 = vunpack.c.l.b16 %v3326
      %v3459 = vunpack.c.l.b16 %v3327
      %v3460 = vunpack.c.l.b16 %v3328
      %v3461 = vpack.c.b16 %v3398, %v3397
      %v3462 = vpack.c.b16 %v3400, %v3399
      %v3463 = vpack.c.b16 %v3402, %v3401
      %v3464 = vpack.c.b16 %v3404, %v3403
      %v3465 = vpack.c.b16 %v3406, %v3405
      %v3466 = vpack.c.b16 %v3408, %v3407
      %v3467 = vpack.c.b16 %v3410, %v3409
      %v3468 = vpack.c.b16 %v3412, %v3411
      %v3469 = vpack.c.b16 %v3414, %v3413
      %v3470 = vpack.c.b16 %v3416, %v3415
      %v3471 = vpack.c.b16 %v3418, %v3417
      %v3472 = vpack.c.b16 %v3420, %v3419
      %v3473 = vpack.c.b16 %v3422, %v3421
      %v3474 = vpack.c.b16 %v3424, %v3423
      %v3475 = vpack.c.b16 %v3426, %v3425
      %v3476 = vpack.c.b16 %v3428, %v3427
      %v3477 = vpack.c.b16 %v3430, %v3429
      %v3478 = vpack.c.b16 %v3432, %v3431
      %v3479 = vpack.c.b16 %v3434, %v3433
      %v3480 = vpack.c.b16 %v3436, %v3435
      %v3481 = vpack.c.b16 %v3438, %v3437
      %v3482 = vpack.c.b16 %v3440, %v3439
      %v3483 = vpack.c.b16 %v3442, %v3441
      %v3484 = vpack.c.b16 %v3444, %v3443
      %v3485 = vpack.c.b16 %v3446, %v3445
      %v3486 = vpack.c.b16 %v3448, %v3447
      %v3487 = vpack.c.b16 %v3450, %v3449
      %v3488 = vpack.c.b16 %v3452, %v3451
      %v3489 = vpack.c.b16 %v3454, %v3453
      %v3490 = vpack.c.b16 %v3456, %v3455
      %v3491 = vpack.c.b16 %v3458, %v3457
      %v3492 = vpack.c.b16 %v3460, %v3459
      %3525 = vmatpush.bf16.msra.mxu0 %v3468
      %3526 = vmatpush.bf16.msra.mxu0 %v3467
      %3527 = vmatpush.bf16.msra.mxu0 %v3466
      %3528 = vmatpush.bf16.msra.mxu0 %v3465
      %3529 = vmatpush.bf16.msra.mxu0 %v3464
      %3530 = vmatpush.bf16.msra.mxu0 %v3463
      %3531 = vmatpush.bf16.msra.mxu0 %v3462
      %3532 = vmatpush.bf16.msra.mxu0 %v3461
      %3533 = vmatmul.bf16.gmra.mxu0 %v3261
      %v3534 = vpop.f32.mrf.mxu0
      %v3535 = vadd.f32 %v3331, %v3534
      %v3536 = vpop.f32.mrf.mxu0
      %3537 = vdwg.mxu0
      %3538 = vmatpush.bf16.msra.mxu0 %v3476
      %3539 = vmatpush.bf16.msra.mxu0 %v3475
      %3540 = vmatpush.bf16.msra.mxu0 %v3474
      %3541 = vmatpush.bf16.msra.mxu0 %v3473
      %3542 = vmatpush.bf16.msra.mxu0 %v3472
      %3543 = vmatpush.bf16.msra.mxu0 %v3471
      %3544 = vmatpush.bf16.msra.mxu0 %v3470
      %3545 = vmatpush.bf16.msra.mxu0 %v3469
      %3546 = vmatmul.bf16.gmra.mxu0 %v3262
      %v3547 = vpop.f32.mrf.mxu0
      %v3548 = vadd.f32 %v3535, %v3547
      %v3549 = vpop.f32.mrf.mxu0
      %3550 = vdwg.mxu0
      %3551 = vmatpush.bf16.msra.mxu0 %v3484
      %3552 = vmatpush.bf16.msra.mxu0 %v3483
      %3553 = vmatpush.bf16.msra.mxu0 %v3482
      %3554 = vmatpush.bf16.msra.mxu0 %v3481
      %3555 = vmatpush.bf16.msra.mxu0 %v3480
      %3556 = vmatpush.bf16.msra.mxu0 %v3479
      %3557 = vmatpush.bf16.msra.mxu0 %v3478
      %3558 = vmatpush.bf16.msra.mxu0 %v3477
      %3559 = vmatmul.bf16.gmra.mxu0 %v3263
      %v3560 = vpop.f32.mrf.mxu0
      %v3561 = vadd.f32 %v3548, %v3560
      %v3562 = vpop.f32.mrf.mxu0
      %3563 = vdwg.mxu0
      %3564 = vmatpush.bf16.msra.mxu0 %v3492
      %3565 = vmatpush.bf16.msra.mxu0 %v3491
      %3566 = vmatpush.bf16.msra.mxu0 %v3490
      %3567 = vmatpush.bf16.msra.mxu0 %v3489
      %3568 = vmatpush.bf16.msra.mxu0 %v3488
      %3569 = vmatpush.bf16.msra.mxu0 %v3487
      %3570 = vmatpush.bf16.msra.mxu0 %v3486
      %3571 = vmatpush.bf16.msra.mxu0 %v3485
      %3572 = vmatmul.bf16.gmra.mxu0 %v3264
      %v3573 = vpop.f32.mrf.mxu0
      %v3574 = vadd.f32 %v3561, %v3573
      %v3575 = vpop.f32.mrf.mxu0
      %3576 = vdwg.mxu0
      %3577 = vst [vmem:[#allocation14] sm:$0x3] %v3574
    $region61: #{tpu_custom_call.1} parent=1 // pred_fallthru
      _
    // Predicated region
    $region62: #{tpu_custom_call.1} parent=1 // pred_check
      _
    $region63: #{tpu_custom_call.1} parent=1 // pred_check_branch
      %3579 = sbr.rel (0) target = $region65
    $region64: #{tpu_custom_call.1} parent=1 // pred_region
      %3581 = vsyncadd [#allocation5], 0
      %s3583 = sshll.u32 [#allocation14], 4
      %s3584 = int_to_ptr.vmem [resolvable:$true] %s3583
      %s3585 = sshll.u32 %s7, 4
      %s3586 = int_to_ptr.hbm [resolvable:$true] %s3585
      %3588 = dma.vmem_to_hbm [thread:$0]  %s3584, 32, %s3586, [#allocation5]
    $region65: #{tpu_custom_call.1} parent=1 // pred_fallthru
      _
    // Predicated region
    $region66: #{tpu_custom_call.1} parent=1 // pred_check
      _
    $region67: #{tpu_custom_call.1} parent=1 // pred_check_branch
      %3590 = sbr.rel (0) target = $region69
    $region68: #{tpu_custom_call.1} parent=1 // pred_region
      %3592 = dma.done [#allocation5], 32
    $region69: #{tpu_custom_call.1} parent=1 // pred_fallthru
      _
    %3593 = vsyncpa [#allocation4], 1
    %3594 = vsyncpa [#allocation7], 1
    %3595 = vsyncpa [#allocation10], 1
    %3596 = vsyncpa [#allocation13], 1
    %3597 = vsyncpa [#allocation5], 1

</llo_original>
